<compile_context>
chip_gen: v6e
topology: v6e:2x2x1
jax: 0.10.0
libtpu: 0.0.40
codegen_flags: <defaults>
</compile_context>

<pallas_src>
import jax
import jax.numpy as jnp
from jax.experimental import pallas as pl
from jax.experimental.pallas import tpu as pltpu


I_DIM = 28 * 28          # 784 (multiple of 16 -> valid bf16 sublane dim, unpadded)
N1, N1_PAD = 300, 384    # round_up(300, 128)
N2, N2_PAD = 100, 128    # round_up(100, 128)

_MiB = 1024 * 1024


def _round_up(x, m):
    return ((x + m - 1) // m) * m


def lenet_kernel(x_ref, w1_ref, b1_ref, w2_ref, b2_ref, w3_ref, b3_ref, o_ref):
    # x tile: (tb, 784) bf16. Weights: bf16 (lane-padded N). Biases: f32.
    # All matmuls accumulate in f32; elementwise math stays in f32.

    # Layer 1: Linear(784 -> 300) + ReLU
    h1 = jnp.dot(x_ref[...], w1_ref[...],
                 preferred_element_type=jnp.float32) + b1_ref[...]
    h1 = jnp.maximum(h1, 0.0)

    # Layer 2: Linear(300 -> 100) + ReLU
    h2 = jnp.dot(h1.astype(jnp.bfloat16), w2_ref[...],
                 preferred_element_type=jnp.float32) + b2_ref[...]
    h2 = jnp.maximum(h2, 0.0)

    # Output layer: Linear(100 -> o_dim), no activation
    o = jnp.dot(h2.astype(jnp.bfloat16), w3_ref[...],
                preferred_element_type=jnp.float32) + b3_ref[...]
    o_ref[...] = o.astype(o_ref.dtype)


def pack_params(params):
    """Pad weight/bias N dims to lane multiples; weights cast to bf16.

    K dims are left unpadded (784 / 384 / 128 are already sublane/lane friendly).
    Zero padding is exact: padded K rows contribute 0, padded N columns carry 0
    bias -> relu(0) = 0, padded output columns are sliced off in the wrapper.
    """
    w1, b1, w2, b2, w3, b3 = params
    o_dim = w3.shape[1]
    o_pad = _round_up(o_dim, 128)

    def pad_w(w, kp, np_):
        k, n = w.shape
        return jnp.pad(w, ((0, kp - k), (0, np_ - n))).astype(jnp.bfloat16)

    def pad_b(b, np_):
        return jnp.pad(b, ((0, 0), (0, np_ - b.shape[1]))).astype(jnp.float32)

    return (
        pad_w(w1, I_DIM, N1_PAD), pad_b(b1, N1_PAD),
        pad_w(w2, N1_PAD, N2_PAD), pad_b(b2, N2_PAD),
        pad_w(w3, N2_PAD, o_pad), pad_b(b3, o_pad),
    ), o_dim, o_pad


def _choose_tile(b8, tile_b):
    """Batch tile: multiple of 16 (bf16 sublanes) unless it spans the whole batch;
    capped so the grid has >= 2 steps (v7x has 2 TensorCores per chip)."""
    if b8 <= 16:
        return b8
    two_step_cap = _round_up(pl.cdiv(b8, 2), 16)
    tb = min(_round_up(min(tile_b, b8), 16), two_step_cap)
    return max(tb, 16)


def _vmem_limit_bytes(tb, o_pad, out_itemsize):
    """Derive the scoped-VMEM limit from actual buffer sizes (cap 48 MiB for v7x)."""
    x_buf = 2 * tb * I_DIM * 2                                   # bf16 x, 2 buffers
    o_buf = 2 * tb * o_pad * out_itemsize                        # output, 2 buffers
    w_buf = 2 * 2 * (I_DIM * N1_PAD + N1_PAD * N2_PAD + N2_PAD * o_pad)  # bf16 wts
    b_buf = 2 * 4 * (N1_PAD + N2_PAD + o_pad)                    # f32 biases
    inter = tb * (N1_PAD + N2_PAD) * (4 + 2)                     # f32 h1/h2 + bf16 casts
    est = x_buf + o_buf + w_buf + b_buf + inter
    return int(min(48 * _MiB, max(24 * _MiB, 2 * est)))


def lenet300_100_forward(x, packed, o_dim, o_pad, tile_b=2048,
                         out_dtype=jnp.float32):
    """x: any shape whose trailing dims flatten to 784 (e.g. (B, 1, 28, 28))."""
    w1p, b1p, w2p, b2p, w3p, b3p = packed

    x2d = x.reshape(-1, I_DIM)
    batch = x2d.shape[0]

    # Feed x as bf16 (halves the dominant HBM stream; matmul accumulates in f32).
    xb = x2d.astype(jnp.bfloat16)
    # Tail-pad only to a sublane multiple (<= 7 rows); XLA fuses it with the cast,
    # so there is no extra full-batch copy in HBM.
    b8 = _round_up(max(batch, 1), 8)
    if b8 != batch:
        xb = jnp.pad(xb, ((0, b8 - batch), (0, 0)))

    tb = _choose_tile(b8, tile_b)
    grid = (pl.cdiv(b8, tb),)   # ragged final block allowed; extra rows discarded

    out_itemsize = jnp.dtype(out_dtype).itemsize
    flops = 2 * b8 * (I_DIM * N1_PAD + N1_PAD * N2_PAD + N2_PAD * o_pad)
    bytes_accessed = (
        xb.size * 2 + b8 * o_pad * out_itemsize
        + (w1p.size + w2p.size + w3p.size) * 2
        + (b1p.size + b2p.size + b3p.size) * 4
    )

    const = lambda i: (0, 0)  # weights/biases: VMEM-resident, fetched once

    out_padded = pl.pallas_call(
        lenet_kernel,
        out_shape=jax.ShapeDtypeStruct((b8, o_pad), out_dtype),
        grid=grid,
        in_specs=[
            pl.BlockSpec((tb, I_DIM), lambda i: (i, 0)),   # x: streamed bf16
            pl.BlockSpec((I_DIM, N1_PAD), const),
            pl.BlockSpec((1, N1_PAD), const),
            pl.BlockSpec((N1_PAD, N2_PAD), const),
            pl.BlockSpec((1, N2_PAD), const),
            pl.BlockSpec((N2_PAD, o_pad), const),
            pl.BlockSpec((1, o_pad), const),
        ],
        out_specs=pl.BlockSpec((tb, o_pad), lambda i: (i, 0)),
        compiler_params=pltpu.CompilerParams(
            dimension_semantics=("parallel",),
            vmem_limit_bytes=_vmem_limit_bytes(tb, o_pad, out_itemsize),
        ),
        cost_estimate=pl.CostEstimate(
            flops=flops, transcendentals=0, bytes_accessed=bytes_accessed),
    )(xb, w1p, b1p, w2p, b2p, w3p, b3p)

    return out_padded[:batch, :o_dim]


def init_params(key, i_dim=I_DIM, o_dim=10):
    """Deterministic PyTorch-Linear-style uniform init, weights as (in, out)."""
    ks = jax.random.split(key, 6)

    def linear(kw, kb, fan_in, fan_out):
        bound = 1.0 / jnp.sqrt(float(fan_in))
        w = jax.random.uniform(kw, (fan_in, fan_out), jnp.float32, -bound, bound)
        b = jax.random.uniform(kb, (1, fan_out), jnp.float32, -bound, bound)
        return w, b

    w1, b1 = linear(ks[0], ks[1], i_dim, N1)
    w2, b2 = linear(ks[2], ks[3], N1, N2)
    w3, b3 = linear(ks[4], ks[5], N2, o_dim)
    return (w1, b1, w2, b2, w3, b3)


def _ref_bf16(x2d, packed, o_dim):
    """Pure-JAX reference of the exact bf16-operand / f32-accumulate math."""
    w1p, b1p, w2p, b2p, w3p, b3p = packed
    xb = x2d.astype(jnp.bfloat16)
    h1 = jnp.maximum(
        jnp.dot(xb, w1p, preferred_element_type=jnp.float32) + b1p, 0.0)
    h2 = jnp.maximum(
        jnp.dot(h1.astype(jnp.bfloat16), w2p,
                preferred_element_type=jnp.float32) + b2p, 0.0)
    o = jnp.dot(h2.astype(jnp.bfloat16), w3p,
                preferred_element_type=jnp.float32) + b3p
    return o[:, :o_dim]


def _ref_f32(x2d, params):
    w1, b1, w2, b2, w3, b3 = params
    h1 = jnp.maximum(x2d @ w1 + b1, 0.0)
    h2 = jnp.maximum(h1 @ w2 + b2, 0.0)
    return h2 @ w3 + b3


if __name__ == "__main__":
    key = jax.random.PRNGKey(0)
    k_x, k_p = jax.random.split(key)

    o_dim = 10
    params = init_params(k_p, I_DIM, o_dim)
    packed, o_dim, o_pad = pack_params(params)

    # Small MNIST-like input (NCHW); forward flattens to (B, 784).
    batch = 2
    x = jax.random.normal(k_x, (batch, 1, 28, 28), dtype=jnp.float32)

    out = jax.block_until_ready(lenet300_100_forward(x, packed, o_dim, o_pad))
    assert out.shape == (batch, o_dim)

    x2d = x.reshape(-1, I_DIM)
    # Tight check against the identical bf16-operand / f32-accumulate math.
    assert jnp.allclose(out, _ref_bf16(x2d, packed, o_dim), atol=2e-3, rtol=2e-3)
    # Loose check against the original f32 PyTorch-equivalent math.
    assert jnp.allclose(out, _ref_f32(x2d, params), atol=5e-2, rtol=5e-2)

    # Exercise the multi-step grid (>=2 steps for v7x megacore) and the ragged
    # final block path (batch not a multiple of the tile).
    batch2 = 40
    x2 = jax.random.normal(k_x, (batch2, I_DIM), dtype=jnp.float32)
    out2 = jax.block_until_ready(
        lenet300_100_forward(x2, packed, o_dim, o_pad, tile_b=32))
    assert out2.shape == (batch2, o_dim)
    assert jnp.allclose(out2, _ref_bf16(x2, packed, o_dim), atol=2e-3, rtol=2e-3)

    print("KERNEL_OK")
</pallas_src>

<mosaic_0001>
module attributes {stable_mosaic.version = 11 : i64} {
  func.func @lenet_kernel(%arg0: i32, %arg1: memref<8x784xbf16, #tpu.memory_space<vmem>>, %arg2: memref<784x384xbf16, #tpu.memory_space<vmem>>, %arg3: memref<1x384xf32, #tpu.memory_space<vmem>>, %arg4: memref<384x128xbf16, #tpu.memory_space<vmem>>, %arg5: memref<1x128xf32, #tpu.memory_space<vmem>>, %arg6: memref<128x128xbf16, #tpu.memory_space<vmem>>, %arg7: memref<1x128xf32, #tpu.memory_space<vmem>>, %arg8: memref<8x128xf32, #tpu.memory_space<vmem>>) attributes {dimension_semantics = [#tpu.dimension_semantics<parallel>], iteration_bounds = array<i64: 1>, scalar_prefetch = 0 : i64, scratch_operands = 0 : i64, tpu.core_type = #tpu.core_type<tc>, window_params = [{transform_indices = @transform_0, window_bounds = array<i64: 8, 784>}, {pipeline_mode = #tpu.pipeline_mode<synchronous>, transform_indices = @transform_1, window_bounds = array<i64: 784, 384>}, {pipeline_mode = #tpu.pipeline_mode<synchronous>, transform_indices = @transform_2, window_bounds = array<i64: 1, 384>}, {pipeline_mode = #tpu.pipeline_mode<synchronous>, transform_indices = @transform_3, window_bounds = array<i64: 384, 128>}, {pipeline_mode = #tpu.pipeline_mode<synchronous>, transform_indices = @transform_4, window_bounds = array<i64: 1, 128>}, {pipeline_mode = #tpu.pipeline_mode<synchronous>, transform_indices = @transform_5, window_bounds = array<i64: 128, 128>}, {pipeline_mode = #tpu.pipeline_mode<synchronous>, transform_indices = @transform_6, window_bounds = array<i64: 1, 128>}, {transform_indices = @transform_7, window_bounds = array<i64: 8, 128>}]} {
    %c0 = arith.constant 0 : index
    %c0_0 = arith.constant 0 : index
    %0 = vector.load %arg1[%c0, %c0_0] : memref<8x784xbf16, #tpu.memory_space<vmem>>, vector<8x784xbf16>
    %c0_1 = arith.constant 0 : index
    %c0_2 = arith.constant 0 : index
    %1 = vector.load %arg2[%c0_1, %c0_2] : memref<784x384xbf16, #tpu.memory_space<vmem>>, vector<784x384xbf16>
    %cst = arith.constant dense<0.000000e+00> : vector<8x384xf32>
    %2 = tpu.matmul %0, %1, %cst {dimension_numbers = #tpu.dot_dimension_numbers<[1], [0], [0], [1], [0, 0, 1, 1], [], []>} : vector<8x784xbf16>, vector<784x384xbf16>, vector<8x384xf32> -> vector<8x384xf32>
    %c0_3 = arith.constant 0 : index
    %c0_4 = arith.constant 0 : index
    %3 = vector.load %arg3[%c0_3, %c0_4] : memref<1x384xf32, #tpu.memory_space<vmem>>, vector<1x384xf32>
    %4 = vector.broadcast %3 : vector<1x384xf32> to vector<8x384xf32>
    %5 = arith.addf %2, %4 : vector<8x384xf32>
    %cst_5 = arith.constant 0.000000e+00 : f32
    %6 = vector.broadcast %cst_5 : f32 to vector<8x384xf32>
    %7 = arith.maximumf %5, %6 : vector<8x384xf32>
    %8 = arith.truncf %7 : vector<8x384xf32> to vector<8x384xbf16>
    %c0_6 = arith.constant 0 : index
    %c0_7 = arith.constant 0 : index
    %9 = vector.load %arg4[%c0_6, %c0_7] : memref<384x128xbf16, #tpu.memory_space<vmem>>, vector<384x128xbf16>
    %cst_8 = arith.constant dense<0.000000e+00> : vector<8x128xf32>
    %10 = tpu.matmul %8, %9, %cst_8 {dimension_numbers = #tpu.dot_dimension_numbers<[1], [0], [0], [1], [0, 0, 1, 1], [], []>} : vector<8x384xbf16>, vector<384x128xbf16>, vector<8x128xf32> -> vector<8x128xf32>
    %c0_9 = arith.constant 0 : index
    %c0_10 = arith.constant 0 : index
    %11 = vector.load %arg5[%c0_9, %c0_10] : memref<1x128xf32, #tpu.memory_space<vmem>>, vector<1x128xf32>
    %12 = vector.broadcast %11 : vector<1x128xf32> to vector<8x128xf32>
    %13 = arith.addf %10, %12 : vector<8x128xf32>
    %cst_11 = arith.constant 0.000000e+00 : f32
    %14 = vector.broadcast %cst_11 : f32 to vector<8x128xf32>
    %15 = arith.maximumf %13, %14 : vector<8x128xf32>
    %16 = arith.truncf %15 : vector<8x128xf32> to vector<8x128xbf16>
    %c0_12 = arith.constant 0 : index
    %c0_13 = arith.constant 0 : index
    %17 = vector.load %arg6[%c0_12, %c0_13] : memref<128x128xbf16, #tpu.memory_space<vmem>>, vector<128x128xbf16>
    %cst_14 = arith.constant dense<0.000000e+00> : vector<8x128xf32>
    %18 = tpu.matmul %16, %17, %cst_14 {dimension_numbers = #tpu.dot_dimension_numbers<[1], [0], [0], [1], [0, 0, 1, 1], [], []>} : vector<8x128xbf16>, vector<128x128xbf16>, vector<8x128xf32> -> vector<8x128xf32>
    %c0_15 = arith.constant 0 : index
    %c0_16 = arith.constant 0 : index
    %19 = vector.load %arg7[%c0_15, %c0_16] : memref<1x128xf32, #tpu.memory_space<vmem>>, vector<1x128xf32>
    %20 = vector.broadcast %19 : vector<1x128xf32> to vector<8x128xf32>
    %21 = arith.addf %18, %20 : vector<8x128xf32>
    %c0_17 = arith.constant 0 : index
    %c0_18 = arith.constant 0 : index
    %22 = vector.load %arg8[%c0_17, %c0_18] : memref<8x128xf32, #tpu.memory_space<vmem>>, vector<8x128xf32>
    tpu.vector_store %arg8[%c0_17, %c0_18], %21 {strides = array<i32>} : memref<8x128xf32, #tpu.memory_space<vmem>>, vector<8x128xf32>,
    return
  }
  func.func @transform_0(%arg0: i32) -> (i32, i32) {
    %c0_i32 = arith.constant 0 : i32
    %c0_i32_0 = arith.constant 0 : i32
    return %arg0, %c0_i32 : i32, i32
  }
  func.func @transform_1(%arg0: i32) -> (i32, i32) {
    %c0_i32 = arith.constant 0 : i32
    %c0_i32_0 = arith.constant 0 : i32
    %c0_i32_1 = arith.constant 0 : i32
    return %c0_i32, %c0_i32_0 : i32, i32
  }
  func.func @transform_2(%arg0: i32) -> (i32, i32) {
    %c0_i32 = arith.constant 0 : i32
    %c0_i32_0 = arith.constant 0 : i32
    %c0_i32_1 = arith.constant 0 : i32
    return %c0_i32, %c0_i32_0 : i32, i32
  }
  func.func @transform_3(%arg0: i32) -> (i32, i32) {
    %c0_i32 = arith.constant 0 : i32
    %c0_i32_0 = arith.constant 0 : i32
    %c0_i32_1 = arith.constant 0 : i32
    return %c0_i32, %c0_i32_0 : i32, i32
  }
  func.func @transform_4(%arg0: i32) -> (i32, i32) {
    %c0_i32 = arith.constant 0 : i32
    %c0_i32_0 = arith.constant 0 : i32
    %c0_i32_1 = arith.constant 0 : i32
    return %c0_i32, %c0_i32_0 : i32, i32
  }
  func.func @transform_5(%arg0: i32) -> (i32, i32) {
    %c0_i32 = arith.constant 0 : i32
    %c0_i32_0 = arith.constant 0 : i32
    %c0_i32_1 = arith.constant 0 : i32
    return %c0_i32, %c0_i32_0 : i32, i32
  }
  func.func @transform_6(%arg0: i32) -> (i32, i32) {
    %c0_i32 = arith.constant 0 : i32
    %c0_i32_0 = arith.constant 0 : i32
    %c0_i32_1 = arith.constant 0 : i32
    return %c0_i32, %c0_i32_0 : i32, i32
  }
  func.func @transform_7(%arg0: i32) -> (i32, i32) {
    %c0_i32 = arith.constant 0 : i32
    %c0_i32_0 = arith.constant 0 : i32
    return %arg0, %c0_i32 : i32, i32
  }
}

</mosaic_0001>

<llo_original>
// kernel: tpu_custom_call.1
$region0: #{tpu_custom_call.1}
  #allocation0 [shape = 'u32[]', space=smem, size = 0x4, offset = 0x4, fixed_abs, tag = 'smem constant byte address 0x4 - core index']
  #allocation1 [shape = 'u32[144,128]{1,0:T(1,128)}', space=vmem, size = 0x12000, scoped, tag = 'internal scratch']
  %s0 = inlined_call_operand.hbm [shape: bf16[8,784], index: 0, kind: input, shape index: {}]
  %s1 = inlined_call_operand.hbm [shape: bf16[784,384], index: 1, kind: input, shape index: {}]
  %s2 = inlined_call_operand.vmem [shape: f32[1,384], index: 2, kind: input, shape index: {}]
  %s3 = inlined_call_operand.hbm [shape: bf16[384,128], index: 3, kind: input, shape index: {}]
  %s4 = inlined_call_operand.vmem [shape: f32[1,128], index: 4, kind: input, shape index: {}]
  %s5 = inlined_call_operand.hbm [shape: bf16[128,128], index: 5, kind: input, shape index: {}]
  %s6 = inlined_call_operand.vmem [shape: f32[1,128], index: 6, kind: input, shape index: {}]
  %s7 = inlined_call_operand.hbm [shape: f32[8,128], index: 7, kind: output, shape index: {}]
  %s8 = sld [smem:[#allocation0]]
  $region54: #{tpu_custom_call.1} parent=0
    _
  %s10 = ssub.s32 1, %s8
  %s11 = scalar_select 0, %s10, %s8
  $region1: #{tpu_custom_call.1} parent=0
    #allocation2 [shape = 'u8[14336]{0}', space=vmem, size = 0x3800, scoped, tag = 'input window, operand 0, single buffered']
    #allocation3 [shape = 's32[1]{0}', space=sflag, size = 0x4, scoped, tag = 'scoped memory for tpu_custom_call.1']
    #allocation4 [shape = 's32[1]{0}', space=sflag, size = 0x4, scoped, tag = 'scoped memory for tpu_custom_call.1']
    #allocation5 [shape = 'u8[602112]{0}', space=vmem, size = 0x93000, scoped, tag = 'input window, operand 1, single buffered']
    #allocation6 [shape = 's32[1]{0}', space=sflag, size = 0x4, scoped, tag = 'scoped memory for tpu_custom_call.1']
    #allocation7 [shape = 'u8[98304]{0}', space=vmem, size = 0x18000, scoped, tag = 'input window, operand 3, single buffered']
    #allocation8 [shape = 'u8[32768]{0}', space=vmem, size = 0x8000, scoped, tag = 'input window, operand 5, single buffered']
    #allocation9 [shape = 's32[1]{0}', space=sflag, size = 0x4, scoped, tag = 'scoped memory for tpu_custom_call.1']
    #allocation10 [shape = 'u8[4096]{0}', space=vmem, size = 0x1000, scoped, tag = 'output window, operand 0, single buffered']
    %12 = vsyncpa [#allocation3], 0
    %13 = vsyncpa [#allocation6], 0
    %14 = vsyncpa [#allocation9], 0
    %15 = vsyncpa [#allocation4], 0
    // Predicated region
    $region2: #{tpu_custom_call.1} parent=1 // pred_check
      _
    $region3: #{tpu_custom_call.1} parent=1 // pred_check_branch
      %17 = sbr.rel (0) target = $region5
    $region4: #{tpu_custom_call.1} parent=1 // pred_region
      %s19 = ssub.s32 448, 448
      %20 = vsyncadd [#allocation3], %s19
      %s22 = sshll.u32 [#allocation2], 4
      %s23 = int_to_ptr.vmem [resolvable:$true] %s22
      %25 = dma.hbm_to_vmem [thread:$0]  %s0, 448, %s23, [#allocation3]
    $region5: #{tpu_custom_call.1} parent=1 // pred_fallthru
      _
    // Predicated region
    $region6: #{tpu_custom_call.1} parent=1 // pred_check
      _
    $region7: #{tpu_custom_call.1} parent=1 // pred_check_branch
      %27 = sbr.rel (0) target = $region9
    $region8: #{tpu_custom_call.1} parent=1 // pred_region
      %s29 = ssub.s32 18816, 18816
      %30 = vsyncadd [#allocation6], %s29
      %s31 = sshll.u32 [#allocation5], 4
      %s32 = int_to_ptr.vmem [resolvable:$true] %s31
      %37 = dma.hbm_to_vmem [thread:$0]  %s1, 18816, %s32, [#allocation6], 192, 192, 12
    $region9: #{tpu_custom_call.1} parent=1 // pred_fallthru
      _
    // Predicated region
    $region10: #{tpu_custom_call.1} parent=1 // pred_check
      _
    $region11: #{tpu_custom_call.1} parent=1 // pred_check_branch
      %39 = sbr.rel (0) target = $region13
    $region12: #{tpu_custom_call.1} parent=1 // pred_region
      _
    $region13: #{tpu_custom_call.1} parent=1 // pred_fallthru
      _
    // Predicated region
    $region14: #{tpu_custom_call.1} parent=1 // pred_check
      _
    $region15: #{tpu_custom_call.1} parent=1 // pred_check_branch
      %41 = sbr.rel (0) target = $region17
    $region16: #{tpu_custom_call.1} parent=1 // pred_region
      %s43 = ssub.s32 3072, 3072
      %44 = vsyncadd [#allocation6], %s43
      %s45 = sshll.u32 [#allocation7], 4
      %s46 = int_to_ptr.vmem [resolvable:$true] %s45
      %51 = dma.hbm_to_vmem [thread:$0]  %s3, 3072, %s46, [#allocation6], 64, 64, 4
    $region17: #{tpu_custom_call.1} parent=1 // pred_fallthru
      _
    // Predicated region
    $region18: #{tpu_custom_call.1} parent=1 // pred_check
      _
    $region19: #{tpu_custom_call.1} parent=1 // pred_check_branch
      %53 = sbr.rel (0) target = $region21
    $region20: #{tpu_custom_call.1} parent=1 // pred_region
      _
    $region21: #{tpu_custom_call.1} parent=1 // pred_fallthru
      _
    // Predicated region
    $region22: #{tpu_custom_call.1} parent=1 // pred_check
      _
    $region23: #{tpu_custom_call.1} parent=1 // pred_check_branch
      %55 = sbr.rel (0) target = $region25
    $region24: #{tpu_custom_call.1} parent=1 // pred_region
      %s57 = ssub.s32 1024, 1024
      %58 = vsyncadd [#allocation9], %s57
      %s59 = sshll.u32 [#allocation8], 4
      %s60 = int_to_ptr.vmem [resolvable:$true] %s59
      %65 = dma.hbm_to_vmem [thread:$0]  %s5, 1024, %s60, [#allocation9], 64, 64, 4
    $region25: #{tpu_custom_call.1} parent=1 // pred_fallthru
      _
    // Predicated region
    $region26: #{tpu_custom_call.1} parent=1 // pred_check
      _
    $region27: #{tpu_custom_call.1} parent=1 // pred_check_branch
      %67 = sbr.rel (0) target = $region29
    $region28: #{tpu_custom_call.1} parent=1 // pred_region
      _
    $region29: #{tpu_custom_call.1} parent=1 // pred_fallthru
      _
    // Predicated region
    $region30: #{tpu_custom_call.1} parent=1 // pred_check
      _
    $region31: #{tpu_custom_call.1} parent=1 // pred_check_branch
      %69 = sbr.rel (0) target = $region33
    $region32: #{tpu_custom_call.1} parent=1 // pred_region
      %70 = dma.done [#allocation3], 448
    $region33: #{tpu_custom_call.1} parent=1 // pred_fallthru
      _
    // Predicated region
    $region34: #{tpu_custom_call.1} parent=1 // pred_check
      _
    $region35: #{tpu_custom_call.1} parent=1 // pred_check_branch
      %72 = sbr.rel (0) target = $region37
    $region36: #{tpu_custom_call.1} parent=1 // pred_region
      %73 = dma.done [#allocation6], 18816
    $region37: #{tpu_custom_call.1} parent=1 // pred_fallthru
      _
    // Predicated region
    $region38: #{tpu_custom_call.1} parent=1 // pred_check
      _
    $region39: #{tpu_custom_call.1} parent=1 // pred_check_branch
      %75 = sbr.rel (0) target = $region41
    $region40: #{tpu_custom_call.1} parent=1 // pred_region
      %76 = dma.done [#allocation6], 3072
    $region41: #{tpu_custom_call.1} parent=1 // pred_fallthru
      _
    // Predicated region
    $region42: #{tpu_custom_call.1} parent=1 // pred_check
      _
    $region43: #{tpu_custom_call.1} parent=1 // pred_check_branch
      %78 = sbr.rel (0) target = $region45
    $region44: #{tpu_custom_call.1} parent=1 // pred_region
      %79 = dma.done [#allocation9], 1024
    $region45: #{tpu_custom_call.1} parent=1 // pred_fallthru
      _
    %v81 = vld [vmem:[#allocation2] sm:$0xff]
    %v82 = vld [vmem:[#allocation2 + $0x8] sm:$0xff]
    %v83 = vld [vmem:[#allocation2 + $0x10] sm:$0xff]
    %v84 = vld [vmem:[#allocation2 + $0x18] sm:$0xf]
    %v85 = vld [vmem:[#allocation5] sm:$0xff]
    %v86 = vld [vmem:[#allocation5 + $0x8] sm:$0xf]
    %v87 = vld [vmem:[#allocation5 + $0xc] sm:$0xff]
    %v88 = vld [vmem:[#allocation5 + $0x14] sm:$0xf]
    %v89 = vld [vmem:[#allocation5 + $0x18] sm:$0xff]
    %v90 = vld [vmem:[#allocation5 + $0x20] sm:$0xf]
    %v91 = vld [vmem:[#allocation5 + $0x24] sm:$0xff]
    %v92 = vld [vmem:[#allocation5 + $0x2c] sm:$0xf]
    %v93 = vld [vmem:[#allocation5 + $0x30] sm:$0xff]
    %v94 = vld [vmem:[#allocation5 + $0x38] sm:$0xf]
    %v95 = vld [vmem:[#allocation5 + $0x3c] sm:$0xff]
    %v96 = vld [vmem:[#allocation5 + $0x44] sm:$0xf]
    %v97 = vld [vmem:[#allocation5 + $0x48] sm:$0xff]
    %v98 = vld [vmem:[#allocation5 + $0x50] sm:$0xf]
    %v99 = vld [vmem:[#allocation5 + $0x54] sm:$0xff]
    %v100 = vld [vmem:[#allocation5 + $0x5c] sm:$0xf]
    %v101 = vld [vmem:[#allocation5 + $0x60] sm:$0xff]
    %v102 = vld [vmem:[#allocation5 + $0x68] sm:$0xf]
    %v103 = vld [vmem:[#allocation5 + $0x6c] sm:$0xff]
    %v104 = vld [vmem:[#allocation5 + $0x74] sm:$0xf]
    %v105 = vld [vmem:[#allocation5 + $0x78] sm:$0xff]
    %v106 = vld [vmem:[#allocation5 + $0x80] sm:$0xf]
    %v107 = vld [vmem:[#allocation5 + $0x84] sm:$0xff]
    %v108 = vld [vmem:[#allocation5 + $0x8c] sm:$0xf]
    %v109 = vld [vmem:[#allocation5 + $0x90] sm:$0xff]
    %v110 = vld [vmem:[#allocation5 + $0x98] sm:$0xf]
    %v111 = vld [vmem:[#allocation5 + $0x9c] sm:$0xff]
    %v112 = vld [vmem:[#allocation5 + $0xa4] sm:$0xf]
    %v113 = vld [vmem:[#allocation5 + $0xa8] sm:$0xff]
    %v114 = vld [vmem:[#allocation5 + $0xb0] sm:$0xf]
    %v115 = vld [vmem:[#allocation5 + $0xb4] sm:$0xff]
    %v116 = vld [vmem:[#allocation5 + $0xbc] sm:$0xf]
    %v117 = vld [vmem:[#allocation5 + $0xc0] sm:$0xff]
    %v118 = vld [vmem:[#allocation5 + $0xc8] sm:$0xf]
    %v119 = vld [vmem:[#allocation5 + $0xcc] sm:$0xff]
    %v120 = vld [vmem:[#allocation5 + $0xd4] sm:$0xf]
    %v121 = vld [vmem:[#allocation5 + $0xd8] sm:$0xff]
    %v122 = vld [vmem:[#allocation5 + $0xe0] sm:$0xf]
    %v123 = vld [vmem:[#allocation5 + $0xe4] sm:$0xff]
    %v124 = vld [vmem:[#allocation5 + $0xec] sm:$0xf]
    %v125 = vld [vmem:[#allocation5 + $0xf0] sm:$0xff]
    %v126 = vld [vmem:[#allocation5 + $0xf8] sm:$0xf]
    %v127 = vld [vmem:[#allocation5 + $0xfc] sm:$0xff]
    %v128 = vld [vmem:[#allocation5 + $0x104] sm:$0xf]
    %v129 = vld [vmem:[#allocation5 + $0x108] sm:$0xff]
    %v130 = vld [vmem:[#allocation5 + $0x110] sm:$0xf]
    %v131 = vld [vmem:[#allocation5 + $0x114] sm:$0xff]
    %v132 = vld [vmem:[#allocation5 + $0x11c] sm:$0xf]
    %v133 = vld [vmem:[#allocation5 + $0x120] sm:$0xff]
    %v134 = vld [vmem:[#allocation5 + $0x128] sm:$0xf]
    %v135 = vld [vmem:[#allocation5 + $0x12c] sm:$0xff]
    %v136 = vld [vmem:[#allocation5 + $0x134] sm:$0xf]
    %v137 = vld [vmem:[#allocation5 + $0x138] sm:$0xff]
    %v138 = vld [vmem:[#allocation5 + $0x140] sm:$0xf]
    %v139 = vld [vmem:[#allocation5 + $0x144] sm:$0xff]
    %v140 = vld [vmem:[#allocation5 + $0x14c] sm:$0xf]
    %v141 = vld [vmem:[#allocation5 + $0x150] sm:$0xff]
    %v142 = vld [vmem:[#allocation5 + $0x158] sm:$0xf]
    %v143 = vld [vmem:[#allocation5 + $0x15c] sm:$0xff]
    %v144 = vld [vmem:[#allocation5 + $0x164] sm:$0xf]
    %v145 = vld [vmem:[#allocation5 + $0x168] sm:$0xff]
    %v146 = vld [vmem:[#allocation5 + $0x170] sm:$0xf]
    %v147 = vld [vmem:[#allocation5 + $0x174] sm:$0xff]
    %v148 = vld [vmem:[#allocation5 + $0x17c] sm:$0xf]
    %v149 = vld [vmem:[#allocation5 + $0x180] sm:$0xff]
    %v150 = vld [vmem:[#allocation5 + $0x188] sm:$0xf]
    %v151 = vld [vmem:[#allocation5 + $0x18c] sm:$0xff]
    %v152 = vld [vmem:[#allocation5 + $0x194] sm:$0xf]
    %v153 = vld [vmem:[#allocation5 + $0x198] sm:$0xff]
    %v154 = vld [vmem:[#allocation5 + $0x1a0] sm:$0xf]
    %v155 = vld [vmem:[#allocation5 + $0x1a4] sm:$0xff]
    %v156 = vld [vmem:[#allocation5 + $0x1ac] sm:$0xf]
    %v157 = vld [vmem:[#allocation5 + $0x1b0] sm:$0xff]
    %v158 = vld [vmem:[#allocation5 + $0x1b8] sm:$0xf]
    %v159 = vld [vmem:[#allocation5 + $0x1bc] sm:$0xff]
    %v160 = vld [vmem:[#allocation5 + $0x1c4] sm:$0xf]
    %v161 = vld [vmem:[#allocation5 + $0x1c8] sm:$0xff]
    %v162 = vld [vmem:[#allocation5 + $0x1d0] sm:$0xf]
    %v163 = vld [vmem:[#allocation5 + $0x1d4] sm:$0xff]
    %v164 = vld [vmem:[#allocation5 + $0x1dc] sm:$0xf]
    %v165 = vld [vmem:[#allocation5 + $0x1e0] sm:$0xff]
    %v166 = vld [vmem:[#allocation5 + $0x1e8] sm:$0xf]
    %v167 = vld [vmem:[#allocation5 + $0x1ec] sm:$0xff]
    %v168 = vld [vmem:[#allocation5 + $0x1f4] sm:$0xf]
    %v169 = vld [vmem:[#allocation5 + $0x1f8] sm:$0xff]
    %v170 = vld [vmem:[#allocation5 + $0x200] sm:$0xf]
    %v171 = vld [vmem:[#allocation5 + $0x204] sm:$0xff]
    %v172 = vld [vmem:[#allocation5 + $0x20c] sm:$0xf]
    %v173 = vld [vmem:[#allocation5 + $0x210] sm:$0xff]
    %v174 = vld [vmem:[#allocation5 + $0x218] sm:$0xf]
    %v175 = vld [vmem:[#allocation5 + $0x21c] sm:$0xff]
    %v176 = vld [vmem:[#allocation5 + $0x224] sm:$0xf]
    %v177 = vld [vmem:[#allocation5 + $0x228] sm:$0xff]
    %v178 = vld [vmem:[#allocation5 + $0x230] sm:$0xf]
    %v179 = vld [vmem:[#allocation5 + $0x234] sm:$0xff]
    %v180 = vld [vmem:[#allocation5 + $0x23c] sm:$0xf]
    %v181 = vld [vmem:[#allocation5 + $0x240] sm:$0xff]
    %v182 = vld [vmem:[#allocation5 + $0x248] sm:$0xf]
    %v183 = vld [vmem:[#allocation5 + $0x24c] sm:$0xff]
    %v184 = vld [vmem:[#allocation5 + $0x254] sm:$0xf]
    %v185 = vld [vmem:[#allocation5 + $0x258] sm:$0xff]
    %v186 = vld [vmem:[#allocation5 + $0x260] sm:$0xf]
    %v187 = vld [vmem:[#allocation5 + $0x264] sm:$0xff]
    %v188 = vld [vmem:[#allocation5 + $0x26c] sm:$0xf]
    %v189 = vld [vmem:[#allocation5 + $0x270] sm:$0xff]
    %v190 = vld [vmem:[#allocation5 + $0x278] sm:$0xf]
    %v191 = vld [vmem:[#allocation5 + $0x27c] sm:$0xff]
    %v192 = vld [vmem:[#allocation5 + $0x284] sm:$0xf]
    %v193 = vld [vmem:[#allocation5 + $0x288] sm:$0xff]
    %v194 = vld [vmem:[#allocation5 + $0x290] sm:$0xf]
    %v195 = vld [vmem:[#allocation5 + $0x294] sm:$0xff]
    %v196 = vld [vmem:[#allocation5 + $0x29c] sm:$0xf]
    %v197 = vld [vmem:[#allocation5 + $0x2a0] sm:$0xff]
    %v198 = vld [vmem:[#allocation5 + $0x2a8] sm:$0xf]
    %v199 = vld [vmem:[#allocation5 + $0x2ac] sm:$0xff]
    %v200 = vld [vmem:[#allocation5 + $0x2b4] sm:$0xf]
    %v201 = vld [vmem:[#allocation5 + $0x2b8] sm:$0xff]
    %v202 = vld [vmem:[#allocation5 + $0x2c0] sm:$0xf]
    %v203 = vld [vmem:[#allocation5 + $0x2c4] sm:$0xff]
    %v204 = vld [vmem:[#allocation5 + $0x2cc] sm:$0xf]
    %v205 = vld [vmem:[#allocation5 + $0x2d0] sm:$0xff]
    %v206 = vld [vmem:[#allocation5 + $0x2d8] sm:$0xf]
    %v207 = vld [vmem:[#allocation5 + $0x2dc] sm:$0xff]
    %v208 = vld [vmem:[#allocation5 + $0x2e4] sm:$0xf]
    %v209 = vld [vmem:[#allocation5 + $0x2e8] sm:$0xff]
    %v210 = vld [vmem:[#allocation5 + $0x2f0] sm:$0xf]
    %v211 = vld [vmem:[#allocation5 + $0x2f4] sm:$0xff]
    %v212 = vld [vmem:[#allocation5 + $0x2fc] sm:$0xf]
    %v213 = vld [vmem:[#allocation5 + $0x300] sm:$0xff]
    %v214 = vld [vmem:[#allocation5 + $0x308] sm:$0xf]
    %v215 = vld [vmem:[#allocation5 + $0x30c] sm:$0xff]
    %v216 = vld [vmem:[#allocation5 + $0x314] sm:$0xf]
    %v217 = vld [vmem:[#allocation5 + $0x318] sm:$0xff]
    %v218 = vld [vmem:[#allocation5 + $0x320] sm:$0xf]
    %v219 = vld [vmem:[#allocation5 + $0x324] sm:$0xff]
    %v220 = vld [vmem:[#allocation5 + $0x32c] sm:$0xf]
    %v221 = vld [vmem:[#allocation5 + $0x330] sm:$0xff]
    %v222 = vld [vmem:[#allocation5 + $0x338] sm:$0xf]
    %v223 = vld [vmem:[#allocation5 + $0x33c] sm:$0xff]
    %v224 = vld [vmem:[#allocation5 + $0x344] sm:$0xf]
    %v225 = vld [vmem:[#allocation5 + $0x348] sm:$0xff]
    %v226 = vld [vmem:[#allocation5 + $0x350] sm:$0xf]
    %v227 = vld [vmem:[#allocation5 + $0x354] sm:$0xff]
    %v228 = vld [vmem:[#allocation5 + $0x35c] sm:$0xf]
    %v229 = vld [vmem:[#allocation5 + $0x360] sm:$0xff]
    %v230 = vld [vmem:[#allocation5 + $0x368] sm:$0xf]
    %v231 = vld [vmem:[#allocation5 + $0x36c] sm:$0xff]
    %v232 = vld [vmem:[#allocation5 + $0x374] sm:$0xf]
    %v233 = vld [vmem:[#allocation5 + $0x378] sm:$0xff]
    %v234 = vld [vmem:[#allocation5 + $0x380] sm:$0xf]
    %v235 = vld [vmem:[#allocation5 + $0x384] sm:$0xff]
    %v236 = vld [vmem:[#allocation5 + $0x38c] sm:$0xf]
    %v237 = vld [vmem:[#allocation5 + $0x390] sm:$0xff]
    %v238 = vld [vmem:[#allocation5 + $0x398] sm:$0xf]
    %v239 = vld [vmem:[#allocation5 + $0x39c] sm:$0xff]
    %v240 = vld [vmem:[#allocation5 + $0x3a4] sm:$0xf]
    %v241 = vld [vmem:[#allocation5 + $0x3a8] sm:$0xff]
    %v242 = vld [vmem:[#allocation5 + $0x3b0] sm:$0xf]
    %v243 = vld [vmem:[#allocation5 + $0x3b4] sm:$0xff]
    %v244 = vld [vmem:[#allocation5 + $0x3bc] sm:$0xf]
    %v245 = vld [vmem:[#allocation5 + $0x3c0] sm:$0xff]
    %v246 = vld [vmem:[#allocation5 + $0x3c8] sm:$0xf]
    %v247 = vld [vmem:[#allocation5 + $0x3cc] sm:$0xff]
    %v248 = vld [vmem:[#allocation5 + $0x3d4] sm:$0xf]
    %v249 = vld [vmem:[#allocation5 + $0x3d8] sm:$0xff]
    %v250 = vld [vmem:[#allocation5 + $0x3e0] sm:$0xf]
    %v251 = vld [vmem:[#allocation5 + $0x3e4] sm:$0xff]
    %v252 = vld [vmem:[#allocation5 + $0x3ec] sm:$0xf]
    %v253 = vld [vmem:[#allocation5 + $0x3f0] sm:$0xff]
    %v254 = vld [vmem:[#allocation5 + $0x3f8] sm:$0xf]
    %v255 = vld [vmem:[#allocation5 + $0x3fc] sm:$0xff]
    %v256 = vld [vmem:[#allocation5 + $0x404] sm:$0xf]
    %v257 = vld [vmem:[#allocation5 + $0x408] sm:$0xff]
    %v258 = vld [vmem:[#allocation5 + $0x410] sm:$0xf]
    %v259 = vld [vmem:[#allocation5 + $0x414] sm:$0xff]
    %v260 = vld [vmem:[#allocation5 + $0x41c] sm:$0xf]
    %v261 = vld [vmem:[#allocation5 + $0x420] sm:$0xff]
    %v262 = vld [vmem:[#allocation5 + $0x428] sm:$0xf]
    %v263 = vld [vmem:[#allocation5 + $0x42c] sm:$0xff]
    %v264 = vld [vmem:[#allocation5 + $0x434] sm:$0xf]
    %v265 = vld [vmem:[#allocation5 + $0x438] sm:$0xff]
    %v266 = vld [vmem:[#allocation5 + $0x440] sm:$0xf]
    %v267 = vld [vmem:[#allocation5 + $0x444] sm:$0xff]
    %v268 = vld [vmem:[#allocation5 + $0x44c] sm:$0xf]
    %v269 = vld [vmem:[#allocation5 + $0x450] sm:$0xff]
    %v270 = vld [vmem:[#allocation5 + $0x458] sm:$0xf]
    %v271 = vld [vmem:[#allocation5 + $0x45c] sm:$0xff]
    %v272 = vld [vmem:[#allocation5 + $0x464] sm:$0xf]
    %v273 = vld [vmem:[#allocation5 + $0x468] sm:$0xff]
    %v274 = vld [vmem:[#allocation5 + $0x470] sm:$0xf]
    %v275 = vld [vmem:[#allocation5 + $0x474] sm:$0xff]
    %v276 = vld [vmem:[#allocation5 + $0x47c] sm:$0xf]
    %v277 = vld [vmem:[#allocation5 + $0x480] sm:$0xff]
    %v278 = vld [vmem:[#allocation5 + $0x488] sm:$0xf]
    %v279 = vld [vmem:[#allocation5 + $0x48c] sm:$0xff]
    %v280 = vld [vmem:[#allocation5 + $0x494] sm:$0xf]
    %v281 = vld [vmem:[%s2] sm:$0x7]
    %v283 = vlaneseq
    %v284 = vshrl.u32 %v283, 7
    %v285 = vsub.s32 0, %v284
    %v286 = vrot.slane %v281, %v285
    %v287 = vlaneseq
    %v288 = vshrl.u32 %v287, 7
    %v289 = vsub.s32 1, %v288
    %v290 = vrot.slane %v281, %v289
    %v291 = vlaneseq
    %v292 = vshrl.u32 %v291, 7
    %v293 = vsub.s32 2, %v292
    %v294 = vrot.slane %v281, %v293
    %v302 = vunpack.c.l.b16 %v81
    %v303 = vunpack.c.h.b16 %v81
    %v304 = vunpack.c.l.b16 %v82
    %v305 = vunpack.c.h.b16 %v82
    %v306 = vunpack.c.l.b16 %v83
    %v307 = vunpack.c.h.b16 %v83
    %v308 = vunpack.c.l.b16 %v84
    %v309 = vpack.c.b16 %v302, %v302
    %v310 = vpack.c.b16 %v303, %v303
    %v311 = vpack.c.b16 %v304, %v304
    %v312 = vpack.c.b16 %v305, %v305
    %v313 = vpack.c.b16 %v306, %v306
    %v314 = vpack.c.b16 %v307, %v307
    %v315 = vpack.c.b16 %v308, %v308
    %v518 = vunpack.c.l.b16 %v85
    %v519 = vunpack.c.h.b16 %v85
    %v520 = vunpack.c.l.b16 %v86
    %v521 = vunpack.c.l.b16 %v87
    %v522 = vunpack.c.h.b16 %v87
    %v523 = vunpack.c.l.b16 %v88
    %v524 = vunpack.c.l.b16 %v89
    %v525 = vunpack.c.h.b16 %v89
    %v526 = vunpack.c.l.b16 %v90
    %v527 = vunpack.c.l.b16 %v91
    %v528 = vunpack.c.h.b16 %v91
    %v529 = vunpack.c.l.b16 %v92
    %v530 = vunpack.c.l.b16 %v93
    %v531 = vunpack.c.h.b16 %v93
    %v532 = vunpack.c.l.b16 %v94
    %v533 = vunpack.c.l.b16 %v95
    %v534 = vunpack.c.h.b16 %v95
    %v535 = vunpack.c.l.b16 %v96
    %v536 = vunpack.c.l.b16 %v97
    %v537 = vunpack.c.h.b16 %v97
    %v538 = vunpack.c.l.b16 %v98
    %v539 = vunpack.c.l.b16 %v99
    %v540 = vunpack.c.h.b16 %v99
    %v541 = vunpack.c.l.b16 %v100
    %v542 = vunpack.c.l.b16 %v101
    %v543 = vunpack.c.h.b16 %v101
    %v544 = vunpack.c.l.b16 %v102
    %v545 = vunpack.c.l.b16 %v103
    %v546 = vunpack.c.h.b16 %v103
    %v547 = vunpack.c.l.b16 %v104
    %v548 = vunpack.c.l.b16 %v105
    %v549 = vunpack.c.h.b16 %v105
    %v550 = vunpack.c.l.b16 %v106
    %v551 = vunpack.c.l.b16 %v107
    %v552 = vunpack.c.h.b16 %v107
    %v553 = vunpack.c.l.b16 %v108
    %v554 = vunpack.c.l.b16 %v109
    %v555 = vunpack.c.h.b16 %v109
    %v556 = vunpack.c.l.b16 %v110
    %v557 = vunpack.c.l.b16 %v111
    %v558 = vunpack.c.h.b16 %v111
    %v559 = vunpack.c.l.b16 %v112
    %v560 = vunpack.c.l.b16 %v113
    %v561 = vunpack.c.h.b16 %v113
    %v562 = vunpack.c.l.b16 %v114
    %v563 = vunpack.c.l.b16 %v115
    %v564 = vunpack.c.h.b16 %v115
    %v565 = vunpack.c.l.b16 %v116
    %v566 = vunpack.c.l.b16 %v117
    %v567 = vunpack.c.h.b16 %v117
    %v568 = vunpack.c.l.b16 %v118
    %v569 = vunpack.c.l.b16 %v119
    %v570 = vunpack.c.h.b16 %v119
    %v571 = vunpack.c.l.b16 %v120
    %v572 = vunpack.c.l.b16 %v121
    %v573 = vunpack.c.h.b16 %v121
    %v574 = vunpack.c.l.b16 %v122
    %v575 = vunpack.c.l.b16 %v123
    %v576 = vunpack.c.h.b16 %v123
    %v577 = vunpack.c.l.b16 %v124
    %v578 = vunpack.c.l.b16 %v125
    %v579 = vunpack.c.h.b16 %v125
    %v580 = vunpack.c.l.b16 %v126
    %v581 = vunpack.c.l.b16 %v127
    %v582 = vunpack.c.h.b16 %v127
    %v583 = vunpack.c.l.b16 %v128
    %v584 = vunpack.c.l.b16 %v129
    %v585 = vunpack.c.h.b16 %v129
    %v586 = vunpack.c.l.b16 %v130
    %v587 = vunpack.c.l.b16 %v131
    %v588 = vunpack.c.h.b16 %v131
    %v589 = vunpack.c.l.b16 %v132
    %v590 = vunpack.c.l.b16 %v133
    %v591 = vunpack.c.h.b16 %v133
    %v592 = vunpack.c.l.b16 %v134
    %v593 = vunpack.c.l.b16 %v135
    %v594 = vunpack.c.h.b16 %v135
    %v595 = vunpack.c.l.b16 %v136
    %v596 = vunpack.c.l.b16 %v137
    %v597 = vunpack.c.h.b16 %v137
    %v598 = vunpack.c.l.b16 %v138
    %v599 = vunpack.c.l.b16 %v139
    %v600 = vunpack.c.h.b16 %v139
    %v601 = vunpack.c.l.b16 %v140
    %v602 = vunpack.c.l.b16 %v141
    %v603 = vunpack.c.h.b16 %v141
    %v604 = vunpack.c.l.b16 %v142
    %v605 = vunpack.c.l.b16 %v143
    %v606 = vunpack.c.h.b16 %v143
    %v607 = vunpack.c.l.b16 %v144
    %v608 = vunpack.c.l.b16 %v145
    %v609 = vunpack.c.h.b16 %v145
    %v610 = vunpack.c.l.b16 %v146
    %v611 = vunpack.c.l.b16 %v147
    %v612 = vunpack.c.h.b16 %v147
    %v613 = vunpack.c.l.b16 %v148
    %v614 = vunpack.c.l.b16 %v149
    %v615 = vunpack.c.h.b16 %v149
    %v616 = vunpack.c.l.b16 %v150
    %v617 = vunpack.c.l.b16 %v151
    %v618 = vunpack.c.h.b16 %v151
    %v619 = vunpack.c.l.b16 %v152
    %v620 = vunpack.c.l.b16 %v153
    %v621 = vunpack.c.h.b16 %v153
    %v622 = vunpack.c.l.b16 %v154
    %v623 = vunpack.c.l.b16 %v155
    %v624 = vunpack.c.h.b16 %v155
    %v625 = vunpack.c.l.b16 %v156
    %v626 = vunpack.c.l.b16 %v157
    %v627 = vunpack.c.h.b16 %v157
    %v628 = vunpack.c.l.b16 %v158
    %v629 = vunpack.c.l.b16 %v159
    %v630 = vunpack.c.h.b16 %v159
    %v631 = vunpack.c.l.b16 %v160
    %v632 = vunpack.c.l.b16 %v161
    %v633 = vunpack.c.h.b16 %v161
    %v634 = vunpack.c.l.b16 %v162
    %v635 = vunpack.c.l.b16 %v163
    %v636 = vunpack.c.h.b16 %v163
    %v637 = vunpack.c.l.b16 %v164
    %v638 = vunpack.c.l.b16 %v165
    %v639 = vunpack.c.h.b16 %v165
    %v640 = vunpack.c.l.b16 %v166
    %v641 = vunpack.c.l.b16 %v167
    %v642 = vunpack.c.h.b16 %v167
    %v643 = vunpack.c.l.b16 %v168
    %v644 = vunpack.c.l.b16 %v169
    %v645 = vunpack.c.h.b16 %v169
    %v646 = vunpack.c.l.b16 %v170
    %v647 = vunpack.c.l.b16 %v171
    %v648 = vunpack.c.h.b16 %v171
    %v649 = vunpack.c.l.b16 %v172
    %v650 = vunpack.c.l.b16 %v173
    %v651 = vunpack.c.h.b16 %v173
    %v652 = vunpack.c.l.b16 %v174
    %v653 = vunpack.c.l.b16 %v175
    %v654 = vunpack.c.h.b16 %v175
    %v655 = vunpack.c.l.b16 %v176
    %v656 = vunpack.c.l.b16 %v177
    %v657 = vunpack.c.h.b16 %v177
    %v658 = vunpack.c.l.b16 %v178
    %v659 = vunpack.c.l.b16 %v179
    %v660 = vunpack.c.h.b16 %v179
    %v661 = vunpack.c.l.b16 %v180
    %v662 = vunpack.c.l.b16 %v181
    %v663 = vunpack.c.h.b16 %v181
    %v664 = vunpack.c.l.b16 %v182
    %v665 = vunpack.c.l.b16 %v183
    %v666 = vunpack.c.h.b16 %v183
    %v667 = vunpack.c.l.b16 %v184
    %v668 = vunpack.c.l.b16 %v185
    %v669 = vunpack.c.h.b16 %v185
    %v670 = vunpack.c.l.b16 %v186
    %v671 = vunpack.c.l.b16 %v187
    %v672 = vunpack.c.h.b16 %v187
    %v673 = vunpack.c.l.b16 %v188
    %v674 = vunpack.c.l.b16 %v189
    %v675 = vunpack.c.h.b16 %v189
    %v676 = vunpack.c.l.b16 %v190
    %v677 = vunpack.c.l.b16 %v191
    %v678 = vunpack.c.h.b16 %v191
    %v679 = vunpack.c.l.b16 %v192
    %v680 = vunpack.c.l.b16 %v193
    %v681 = vunpack.c.h.b16 %v193
    %v682 = vunpack.c.l.b16 %v194
    %v683 = vunpack.c.l.b16 %v195
    %v684 = vunpack.c.h.b16 %v195
    %v685 = vunpack.c.l.b16 %v196
    %v686 = vunpack.c.l.b16 %v197
    %v687 = vunpack.c.h.b16 %v197
    %v688 = vunpack.c.l.b16 %v198
    %v689 = vunpack.c.l.b16 %v199
    %v690 = vunpack.c.h.b16 %v199
    %v691 = vunpack.c.l.b16 %v200
    %v692 = vunpack.c.l.b16 %v201
    %v693 = vunpack.c.h.b16 %v201
    %v694 = vunpack.c.l.b16 %v202
    %v695 = vunpack.c.l.b16 %v203
    %v696 = vunpack.c.h.b16 %v203
    %v697 = vunpack.c.l.b16 %v204
    %v698 = vunpack.c.l.b16 %v205
    %v699 = vunpack.c.h.b16 %v205
    %v700 = vunpack.c.l.b16 %v206
    %v701 = vunpack.c.l.b16 %v207
    %v702 = vunpack.c.h.b16 %v207
    %v703 = vunpack.c.l.b16 %v208
    %v704 = vunpack.c.l.b16 %v209
    %v705 = vunpack.c.h.b16 %v209
    %v706 = vunpack.c.l.b16 %v210
    %v707 = vunpack.c.l.b16 %v211
    %v708 = vunpack.c.h.b16 %v211
    %v709 = vunpack.c.l.b16 %v212
    %v710 = vunpack.c.l.b16 %v213
    %v711 = vunpack.c.h.b16 %v213
    %v712 = vunpack.c.l.b16 %v214
    %v713 = vunpack.c.l.b16 %v215
    %v714 = vunpack.c.h.b16 %v215
    %v715 = vunpack.c.l.b16 %v216
    %v716 = vunpack.c.l.b16 %v217
    %v717 = vunpack.c.h.b16 %v217
    %v718 = vunpack.c.l.b16 %v218
    %v719 = vunpack.c.l.b16 %v219
    %v720 = vunpack.c.h.b16 %v219
    %v721 = vunpack.c.l.b16 %v220
    %v722 = vunpack.c.l.b16 %v221
    %v723 = vunpack.c.h.b16 %v221
    %v724 = vunpack.c.l.b16 %v222
    %v725 = vunpack.c.l.b16 %v223
    %v726 = vunpack.c.h.b16 %v223
    %v727 = vunpack.c.l.b16 %v224
    %v728 = vunpack.c.l.b16 %v225
    %v729 = vunpack.c.h.b16 %v225
    %v730 = vunpack.c.l.b16 %v226
    %v731 = vunpack.c.l.b16 %v227
    %v732 = vunpack.c.h.b16 %v227
    %v733 = vunpack.c.l.b16 %v228
    %v734 = vunpack.c.l.b16 %v229
    %v735 = vunpack.c.h.b16 %v229
    %v736 = vunpack.c.l.b16 %v230
    %v737 = vunpack.c.l.b16 %v231
    %v738 = vunpack.c.h.b16 %v231
    %v739 = vunpack.c.l.b16 %v232
    %v740 = vunpack.c.l.b16 %v233
    %v741 = vunpack.c.h.b16 %v233
    %v742 = vunpack.c.l.b16 %v234
    %v743 = vunpack.c.l.b16 %v235
    %v744 = vunpack.c.h.b16 %v235
    %v745 = vunpack.c.l.b16 %v236
    %v746 = vunpack.c.l.b16 %v237
    %v747 = vunpack.c.h.b16 %v237
    %v748 = vunpack.c.l.b16 %v238
    %v749 = vunpack.c.l.b16 %v239
    %v750 = vunpack.c.h.b16 %v239
    %v751 = vunpack.c.l.b16 %v240
    %v752 = vunpack.c.l.b16 %v241
    %v753 = vunpack.c.h.b16 %v241
    %v754 = vunpack.c.l.b16 %v242
    %v755 = vunpack.c.l.b16 %v243
    %v756 = vunpack.c.h.b16 %v243
    %v757 = vunpack.c.l.b16 %v244
    %v758 = vunpack.c.l.b16 %v245
    %v759 = vunpack.c.h.b16 %v245
    %v760 = vunpack.c.l.b16 %v246
    %v761 = vunpack.c.l.b16 %v247
    %v762 = vunpack.c.h.b16 %v247
    %v763 = vunpack.c.l.b16 %v248
    %v764 = vunpack.c.l.b16 %v249
    %v765 = vunpack.c.h.b16 %v249
    %v766 = vunpack.c.l.b16 %v250
    %v767 = vunpack.c.l.b16 %v251
    %v768 = vunpack.c.h.b16 %v251
    %v769 = vunpack.c.l.b16 %v252
    %v770 = vunpack.c.l.b16 %v253
    %v771 = vunpack.c.h.b16 %v253
    %v772 = vunpack.c.l.b16 %v254
    %v773 = vunpack.c.l.b16 %v255
    %v774 = vunpack.c.h.b16 %v255
    %v775 = vunpack.c.l.b16 %v256
    %v776 = vunpack.c.l.b16 %v257
    %v777 = vunpack.c.h.b16 %v257
    %v778 = vunpack.c.l.b16 %v258
    %v779 = vunpack.c.l.b16 %v259
    %v780 = vunpack.c.h.b16 %v259
    %v781 = vunpack.c.l.b16 %v260
    %v782 = vunpack.c.l.b16 %v261
    %v783 = vunpack.c.h.b16 %v261
    %v784 = vunpack.c.l.b16 %v262
    %v785 = vunpack.c.l.b16 %v263
    %v786 = vunpack.c.h.b16 %v263
    %v787 = vunpack.c.l.b16 %v264
    %v788 = vunpack.c.l.b16 %v265
    %v789 = vunpack.c.h.b16 %v265
    %v790 = vunpack.c.l.b16 %v266
    %v791 = vunpack.c.l.b16 %v267
    %v792 = vunpack.c.h.b16 %v267
    %v793 = vunpack.c.l.b16 %v268
    %v794 = vunpack.c.l.b16 %v269
    %v795 = vunpack.c.h.b16 %v269
    %v796 = vunpack.c.l.b16 %v270
    %v797 = vunpack.c.l.b16 %v271
    %v798 = vunpack.c.h.b16 %v271
    %v799 = vunpack.c.l.b16 %v272
    %v800 = vunpack.c.l.b16 %v273
    %v801 = vunpack.c.h.b16 %v273
    %v802 = vunpack.c.l.b16 %v274
    %v803 = vunpack.c.l.b16 %v275
    %v804 = vunpack.c.h.b16 %v275
    %v805 = vunpack.c.l.b16 %v276
    %v806 = vunpack.c.l.b16 %v277
    %v807 = vunpack.c.h.b16 %v277
    %v808 = vunpack.c.l.b16 %v278
    %v809 = vunpack.c.l.b16 %v279
    %v810 = vunpack.c.h.b16 %v279
    %v811 = vunpack.c.l.b16 %v280
    %v812 = vpack.c.b16 %v521, %v518
    %v813 = vpack.c.b16 %v522, %v519
    %v814 = vpack.c.b16 %v523, %v520
    %v815 = vpack.c.b16 %v527, %v524
    %v816 = vpack.c.b16 %v528, %v525
    %v817 = vpack.c.b16 %v529, %v526
    %v818 = vpack.c.b16 %v533, %v530
    %v819 = vpack.c.b16 %v534, %v531
    %v820 = vpack.c.b16 %v535, %v532
    %v821 = vpack.c.b16 %v539, %v536
    %v822 = vpack.c.b16 %v540, %v537
    %v823 = vpack.c.b16 %v541, %v538
    %v824 = vpack.c.b16 %v545, %v542
    %v825 = vpack.c.b16 %v546, %v543
    %v826 = vpack.c.b16 %v547, %v544
    %v827 = vpack.c.b16 %v551, %v548
    %v828 = vpack.c.b16 %v552, %v549
    %v829 = vpack.c.b16 %v553, %v550
    %v830 = vpack.c.b16 %v557, %v554
    %v831 = vpack.c.b16 %v558, %v555
    %v832 = vpack.c.b16 %v559, %v556
    %v833 = vpack.c.b16 %v563, %v560
    %v834 = vpack.c.b16 %v564, %v561
    %v835 = vpack.c.b16 %v565, %v562
    %v836 = vpack.c.b16 %v569, %v566
    %v837 = vpack.c.b16 %v570, %v567
    %v838 = vpack.c.b16 %v571, %v568
    %v839 = vpack.c.b16 %v575, %v572
    %v840 = vpack.c.b16 %v576, %v573
    %v841 = vpack.c.b16 %v577, %v574
    %v842 = vpack.c.b16 %v581, %v578
    %v843 = vpack.c.b16 %v582, %v579
    %v844 = vpack.c.b16 %v583, %v580
    %v845 = vpack.c.b16 %v587, %v584
    %v846 = vpack.c.b16 %v588, %v585
    %v847 = vpack.c.b16 %v589, %v586
    %v848 = vpack.c.b16 %v593, %v590
    %v849 = vpack.c.b16 %v594, %v591
    %v850 = vpack.c.b16 %v595, %v592
    %v851 = vpack.c.b16 %v599, %v596
    %v852 = vpack.c.b16 %v600, %v597
    %v853 = vpack.c.b16 %v601, %v598
    %v854 = vpack.c.b16 %v605, %v602
    %v855 = vpack.c.b16 %v606, %v603
    %v856 = vpack.c.b16 %v607, %v604
    %v857 = vpack.c.b16 %v611, %v608
    %v858 = vpack.c.b16 %v612, %v609
    %v859 = vpack.c.b16 %v613, %v610
    %v860 = vpack.c.b16 %v617, %v614
    %v861 = vpack.c.b16 %v618, %v615
    %v862 = vpack.c.b16 %v619, %v616
    %v863 = vpack.c.b16 %v623, %v620
    %v864 = vpack.c.b16 %v624, %v621
    %v865 = vpack.c.b16 %v625, %v622
    %v866 = vpack.c.b16 %v629, %v626
    %v867 = vpack.c.b16 %v630, %v627
    %v868 = vpack.c.b16 %v631, %v628
    %v869 = vpack.c.b16 %v635, %v632
    %v870 = vpack.c.b16 %v636, %v633
    %v871 = vpack.c.b16 %v637, %v634
    %v872 = vpack.c.b16 %v641, %v638
    %v873 = vpack.c.b16 %v642, %v639
    %v874 = vpack.c.b16 %v643, %v640
    %v875 = vpack.c.b16 %v647, %v644
    %v876 = vpack.c.b16 %v648, %v645
    %v877 = vpack.c.b16 %v649, %v646
    %v878 = vpack.c.b16 %v653, %v650
    %v879 = vpack.c.b16 %v654, %v651
    %v880 = vpack.c.b16 %v655, %v652
    %v881 = vpack.c.b16 %v659, %v656
    %v882 = vpack.c.b16 %v660, %v657
    %v883 = vpack.c.b16 %v661, %v658
    %v884 = vpack.c.b16 %v665, %v662
    %v885 = vpack.c.b16 %v666, %v663
    %v886 = vpack.c.b16 %v667, %v664
    %v887 = vpack.c.b16 %v671, %v668
    %v888 = vpack.c.b16 %v672, %v669
    %v889 = vpack.c.b16 %v673, %v670
    %v890 = vpack.c.b16 %v677, %v674
    %v891 = vpack.c.b16 %v678, %v675
    %v892 = vpack.c.b16 %v679, %v676
    %v893 = vpack.c.b16 %v683, %v680
    %v894 = vpack.c.b16 %v684, %v681
    %v895 = vpack.c.b16 %v685, %v682
    %v896 = vpack.c.b16 %v689, %v686
    %v897 = vpack.c.b16 %v690, %v687
    %v898 = vpack.c.b16 %v691, %v688
    %v899 = vpack.c.b16 %v695, %v692
    %v900 = vpack.c.b16 %v696, %v693
    %v901 = vpack.c.b16 %v697, %v694
    %v902 = vpack.c.b16 %v701, %v698
    %v903 = vpack.c.b16 %v702, %v699
    %v904 = vpack.c.b16 %v703, %v700
    %v905 = vpack.c.b16 %v707, %v704
    %v906 = vpack.c.b16 %v708, %v705
    %v907 = vpack.c.b16 %v709, %v706
    %v908 = vpack.c.b16 %v713, %v710
    %v909 = vpack.c.b16 %v714, %v711
    %v910 = vpack.c.b16 %v715, %v712
    %v911 = vpack.c.b16 %v719, %v716
    %v912 = vpack.c.b16 %v720, %v717
    %v913 = vpack.c.b16 %v721, %v718
    %v914 = vpack.c.b16 %v725, %v722
    %v915 = vpack.c.b16 %v726, %v723
    %v916 = vpack.c.b16 %v727, %v724
    %v917 = vpack.c.b16 %v731, %v728
    %v918 = vpack.c.b16 %v732, %v729
    %v919 = vpack.c.b16 %v733, %v730
    %v920 = vpack.c.b16 %v737, %v734
    %v921 = vpack.c.b16 %v738, %v735
    %v922 = vpack.c.b16 %v739, %v736
    %v923 = vpack.c.b16 %v743, %v740
    %v924 = vpack.c.b16 %v744, %v741
    %v925 = vpack.c.b16 %v745, %v742
    %v926 = vpack.c.b16 %v749, %v746
    %v927 = vpack.c.b16 %v750, %v747
    %v928 = vpack.c.b16 %v751, %v748
    %v929 = vpack.c.b16 %v755, %v752
    %v930 = vpack.c.b16 %v756, %v753
    %v931 = vpack.c.b16 %v757, %v754
    %v932 = vpack.c.b16 %v761, %v758
    %v933 = vpack.c.b16 %v762, %v759
    %v934 = vpack.c.b16 %v763, %v760
    %v935 = vpack.c.b16 %v767, %v764
    %v936 = vpack.c.b16 %v768, %v765
    %v937 = vpack.c.b16 %v769, %v766
    %v938 = vpack.c.b16 %v773, %v770
    %v939 = vpack.c.b16 %v774, %v771
    %v940 = vpack.c.b16 %v775, %v772
    %v941 = vpack.c.b16 %v779, %v776
    %v942 = vpack.c.b16 %v780, %v777
    %v943 = vpack.c.b16 %v781, %v778
    %v944 = vpack.c.b16 %v785, %v782
    %v945 = vpack.c.b16 %v786, %v783
    %v946 = vpack.c.b16 %v787, %v784
    %v947 = vpack.c.b16 %v791, %v788
    %v948 = vpack.c.b16 %v792, %v789
    %v949 = vpack.c.b16 %v793, %v790
    %v950 = vpack.c.b16 %v797, %v794
    %v951 = vpack.c.b16 %v798, %v795
    %v952 = vpack.c.b16 %v799, %v796
    %v953 = vpack.c.b16 %v803, %v800
    %v954 = vpack.c.b16 %v804, %v801
    %v955 = vpack.c.b16 %v805, %v802
    %v956 = vpack.c.b16 %v809, %v806
    %v957 = vpack.c.b16 %v810, %v807
    %v958 = vpack.c.b16 %v811, %v808
    %vm1106 = vcmask 130048
    %v1108 = vsel %vm1106, %v315, 0
    %1110 = vmatprep.subr.bf16.mxu0 %v834
    %1111 = vmatpush1.bf16.msra.mxu0 %v833
    %1112 = vmatprep.subr.bf16.mxu0 %v831
    %1113 = vmatpush1.bf16.msra.mxu0 %v830
    %1114 = vmatprep.subr.bf16.mxu0 %v828
    %1115 = vmatpush1.bf16.msra.mxu0 %v827
    %1116 = vmatprep.subr.bf16.mxu0 %v825
    %1117 = vmatpush1.bf16.msra.mxu0 %v824
    %1118 = vmatprep.subr.bf16.mxu0 %v822
    %1119 = vmatpush1.bf16.msra.mxu0 %v821
    %1120 = vmatprep.subr.bf16.mxu0 %v819
    %1121 = vmatpush1.bf16.msra.mxu0 %v818
    %1122 = vmatprep.subr.bf16.mxu0 %v816
    %1123 = vmatpush1.bf16.msra.mxu0 %v815
    %1124 = vmatprep.subr.bf16.mxu0 %v813
    %1125 = vmatpush1.bf16.msra.mxu0 %v812
    %1126 = vmatprep.subr.bf16.mxu0 %v858
    %1127 = vmatpush2.bf16.msra.mxu0 %v857
    %1128 = vmatprep.subr.bf16.mxu0 %v855
    %1129 = vmatpush2.bf16.msra.mxu0 %v854
    %1130 = vmatprep.subr.bf16.mxu0 %v852
    %1131 = vmatpush2.bf16.msra.mxu0 %v851
    %1132 = vmatprep.subr.bf16.mxu0 %v849
    %1133 = vmatpush2.bf16.msra.mxu0 %v848
    %1134 = vmatprep.subr.bf16.mxu0 %v846
    %1135 = vmatpush2.bf16.msra.mxu0 %v845
    %1136 = vmatprep.subr.bf16.mxu0 %v843
    %1137 = vmatpush2.bf16.msra.mxu0 %v842
    %1138 = vmatprep.subr.bf16.mxu0 %v840
    %1139 = vmatpush2.bf16.msra.mxu0 %v839
    %1140 = vmatprep.subr.bf16.mxu0 %v837
    %1141 = vmatpush2.bf16.msra.mxu0 %v836
    %1142 = vmatprep.mubr.bf16.mxu0 %v310
    %1143 = vmatmul.mubr.bf16.gmra.mxu0 %v309
    %v1144 = vpop.f32.mrf.mxu0
    %v1145 = vadd.f32 %v286, %v1144
    %v1146 = vpop.f32.mrf.mxu0
    %v1147 = vadd.f32 %v290, %v1146
    %v1148 = vpop.f32.mrf.mxu0
    %v1149 = vpop.f32.mrf.mxu0
    %1150 = vdwg.mxu0
    %1151 = vmatprep.subr.bf16.mxu0 %v882
    %1152 = vmatpush1.bf16.msra.mxu0 %v881
    %1153 = vmatprep.subr.bf16.mxu0 %v879
    %1154 = vmatpush1.bf16.msra.mxu0 %v878
    %1155 = vmatprep.subr.bf16.mxu0 %v876
    %1156 = vmatpush1.bf16.msra.mxu0 %v875
    %1157 = vmatprep.subr.bf16.mxu0 %v873
    %1158 = vmatpush1.bf16.msra.mxu0 %v872
    %1159 = vmatprep.subr.bf16.mxu0 %v870
    %1160 = vmatpush1.bf16.msra.mxu0 %v869
    %1161 = vmatprep.subr.bf16.mxu0 %v867
    %1162 = vmatpush1.bf16.msra.mxu0 %v866
    %1163 = vmatprep.subr.bf16.mxu0 %v864
    %1164 = vmatpush1.bf16.msra.mxu0 %v863
    %1165 = vmatprep.subr.bf16.mxu0 %v861
    %1166 = vmatpush1.bf16.msra.mxu0 %v860
    %1167 = vmatprep.subr.bf16.mxu0 %v906
    %1168 = vmatpush2.bf16.msra.mxu0 %v905
    %1169 = vmatprep.subr.bf16.mxu0 %v903
    %1170 = vmatpush2.bf16.msra.mxu0 %v902
    %1171 = vmatprep.subr.bf16.mxu0 %v900
    %1172 = vmatpush2.bf16.msra.mxu0 %v899
    %1173 = vmatprep.subr.bf16.mxu0 %v897
    %1174 = vmatpush2.bf16.msra.mxu0 %v896
    %1175 = vmatprep.subr.bf16.mxu0 %v894
    %1176 = vmatpush2.bf16.msra.mxu0 %v893
    %1177 = vmatprep.subr.bf16.mxu0 %v891
    %1178 = vmatpush2.bf16.msra.mxu0 %v890
    %1179 = vmatprep.subr.bf16.mxu0 %v888
    %1180 = vmatpush2.bf16.msra.mxu0 %v887
    %1181 = vmatprep.subr.bf16.mxu0 %v885
    %1182 = vmatpush2.bf16.msra.mxu0 %v884
    %1183 = vmatprep.mubr.bf16.mxu0 %v312
    %1184 = vmatmul.mubr.bf16.gmra.mxu0 %v311
    %v1185 = vpop.f32.mrf.mxu0
    %v1186 = vadd.f32 %v1145, %v1185
    %v1187 = vpop.f32.mrf.mxu0
    %v1188 = vadd.f32 %v1147, %v1187
    %v1189 = vpop.f32.mrf.mxu0
    %v1190 = vpop.f32.mrf.mxu0
    %1191 = vdwg.mxu0
    %1192 = vmatprep.subr.bf16.mxu0 %v930
    %1193 = vmatpush1.bf16.msra.mxu0 %v929
    %1194 = vmatprep.subr.bf16.mxu0 %v927
    %1195 = vmatpush1.bf16.msra.mxu0 %v926
    %1196 = vmatprep.subr.bf16.mxu0 %v924
    %1197 = vmatpush1.bf16.msra.mxu0 %v923
    %1198 = vmatprep.subr.bf16.mxu0 %v921
    %1199 = vmatpush1.bf16.msra.mxu0 %v920
    %1200 = vmatprep.subr.bf16.mxu0 %v918
    %1201 = vmatpush1.bf16.msra.mxu0 %v917
    %1202 = vmatprep.subr.bf16.mxu0 %v915
    %1203 = vmatpush1.bf16.msra.mxu0 %v914
    %1204 = vmatprep.subr.bf16.mxu0 %v912
    %1205 = vmatpush1.bf16.msra.mxu0 %v911
    %1206 = vmatprep.subr.bf16.mxu0 %v909
    %1207 = vmatpush1.bf16.msra.mxu0 %v908
    %1208 = vmatprep.subr.bf16.mxu0 %v954
    %1209 = vmatpush2.bf16.msra.mxu0 %v953
    %1210 = vmatprep.subr.bf16.mxu0 %v951
    %1211 = vmatpush2.bf16.msra.mxu0 %v950
    %1212 = vmatprep.subr.bf16.mxu0 %v948
    %1213 = vmatpush2.bf16.msra.mxu0 %v947
    %1214 = vmatprep.subr.bf16.mxu0 %v945
    %1215 = vmatpush2.bf16.msra.mxu0 %v944
    %1216 = vmatprep.subr.bf16.mxu0 %v942
    %1217 = vmatpush2.bf16.msra.mxu0 %v941
    %1218 = vmatprep.subr.bf16.mxu0 %v939
    %1219 = vmatpush2.bf16.msra.mxu0 %v938
    %1220 = vmatprep.subr.bf16.mxu0 %v936
    %1221 = vmatpush2.bf16.msra.mxu0 %v935
    %1222 = vmatprep.subr.bf16.mxu0 %v933
    %1223 = vmatpush2.bf16.msra.mxu0 %v932
    %1224 = vmatprep.mubr.bf16.mxu0 %v314
    %1225 = vmatmul.mubr.bf16.gmra.mxu0 %v313
    %v1226 = vpop.f32.mrf.mxu0
    %v1227 = vadd.f32 %v1186, %v1226
    %v1228 = vpop.f32.mrf.mxu0
    %v1229 = vadd.f32 %v1188, %v1228
    %v1230 = vpop.f32.mrf.mxu0
    %v1231 = vpop.f32.mrf.mxu0
    %1232 = vdwg.mxu0
    %1233 = vmatprep.subr.bf16.mxu0 0
    %1234 = vmatpush1.bf16.msra.mxu0 0
    %1235 = vmatprep.subr.bf16.mxu0 0
    %1236 = vmatpush1.bf16.msra.mxu0 0
    %1237 = vmatprep.subr.bf16.mxu0 0
    %1238 = vmatpush1.bf16.msra.mxu0 0
    %1239 = vmatprep.subr.bf16.mxu0 0
    %1240 = vmatpush1.bf16.msra.mxu0 0
    %1241 = vmatprep.subr.bf16.mxu0 0
    %1242 = vmatpush1.bf16.msra.mxu0 0
    %1243 = vmatprep.subr.bf16.mxu0 0
    %1244 = vmatpush1.bf16.msra.mxu0 0
    %1245 = vmatprep.subr.bf16.mxu0 0
    %1246 = vmatpush1.bf16.msra.mxu0 0
    %1247 = vmatprep.subr.bf16.mxu0 %v957
    %1248 = vmatpush1.bf16.msra.mxu0 %v956
    %1249 = vmatprep.subr.bf16.mxu0 0
    %1250 = vmatpush2.bf16.msra.mxu0 0
    %1251 = vmatprep.subr.bf16.mxu0 0
    %1252 = vmatpush2.bf16.msra.mxu0 0
    %1253 = vmatprep.subr.bf16.mxu0 0
    %1254 = vmatpush2.bf16.msra.mxu0 0
    %1255 = vmatprep.subr.bf16.mxu0 0
    %1256 = vmatpush2.bf16.msra.mxu0 0
    %1257 = vmatprep.subr.bf16.mxu0 0
    %1258 = vmatpush2.bf16.msra.mxu0 0
    %1259 = vmatprep.subr.bf16.mxu0 0
    %1260 = vmatpush2.bf16.msra.mxu0 0
    %1261 = vmatprep.subr.bf16.mxu0 0
    %1262 = vmatpush2.bf16.msra.mxu0 0
    %1263 = vmatprep.subr.bf16.mxu0 0
    %1264 = vmatpush2.bf16.msra.mxu0 0
    %1265 = vmatprep.mubr.bf16.mxu0 0
    %1266 = vmatmul.mubr.bf16.gmra.mxu0 %v1108
    %v1267 = vpop.f32.mrf.mxu0
    %v1268 = vadd.f32 %v1227, %v1267
    %v1269 = vpop.f32.mrf.mxu0
    %v1270 = vadd.f32 %v1229, %v1269
    %v1271 = vpop.f32.mrf.mxu0
    %v1272 = vpop.f32.mrf.mxu0
    %1273 = vdwg.mxu0
    %1274 = vmatprep.subr.bf16.mxu0 0
    %1275 = vmatpush1.bf16.msra.mxu0 %v835
    %1276 = vmatprep.subr.bf16.mxu0 0
    %1277 = vmatpush1.bf16.msra.mxu0 %v832
    %1278 = vmatprep.subr.bf16.mxu0 0
    %1279 = vmatpush1.bf16.msra.mxu0 %v829
    %1280 = vmatprep.subr.bf16.mxu0 0
    %1281 = vmatpush1.bf16.msra.mxu0 %v826
    %1282 = vmatprep.subr.bf16.mxu0 0
    %1283 = vmatpush1.bf16.msra.mxu0 %v823
    %1284 = vmatprep.subr.bf16.mxu0 0
    %1285 = vmatpush1.bf16.msra.mxu0 %v820
    %1286 = vmatprep.subr.bf16.mxu0 0
    %1287 = vmatpush1.bf16.msra.mxu0 %v817
    %1288 = vmatprep.subr.bf16.mxu0 0
    %1289 = vmatpush1.bf16.msra.mxu0 %v814
    %1290 = vmatprep.subr.bf16.mxu0 0
    %1291 = vmatpush2.bf16.msra.mxu0 %v859
    %1292 = vmatprep.subr.bf16.mxu0 0
    %1293 = vmatpush2.bf16.msra.mxu0 %v856
    %1294 = vmatprep.subr.bf16.mxu0 0
    %1295 = vmatpush2.bf16.msra.mxu0 %v853
    %1296 = vmatprep.subr.bf16.mxu0 0
    %1297 = vmatpush2.bf16.msra.mxu0 %v850
    %1298 = vmatprep.subr.bf16.mxu0 0
    %1299 = vmatpush2.bf16.msra.mxu0 %v847
    %1300 = vmatprep.subr.bf16.mxu0 0
    %1301 = vmatpush2.bf16.msra.mxu0 %v844
    %1302 = vmatprep.subr.bf16.mxu0 0
    %1303 = vmatpush2.bf16.msra.mxu0 %v841
    %1304 = vmatprep.subr.bf16.mxu0 0
    %1305 = vmatpush2.bf16.msra.mxu0 %v838
    %1306 = vmatprep.mubr.bf16.mxu0 %v310
    %1307 = vmatmul.mubr.bf16.gmra.mxu0 %v309
    %v1308 = vpop.f32.mrf.mxu0
    %v1309 = vadd.f32 %v294, %v1308
    %v1310 = vpop.f32.mrf.mxu0
    %v1311 = vpop.f32.mrf.mxu0
    %v1312 = vpop.f32.mrf.mxu0
    %1313 = vdwg.mxu0
    %1314 = vmatprep.subr.bf16.mxu0 0
    %1315 = vmatpush1.bf16.msra.mxu0 %v883
    %1316 = vmatprep.subr.bf16.mxu0 0
    %1317 = vmatpush1.bf16.msra.mxu0 %v880
    %1318 = vmatprep.subr.bf16.mxu0 0
    %1319 = vmatpush1.bf16.msra.mxu0 %v877
    %1320 = vmatprep.subr.bf16.mxu0 0
    %1321 = vmatpush1.bf16.msra.mxu0 %v874
    %1322 = vmatprep.subr.bf16.mxu0 0
    %1323 = vmatpush1.bf16.msra.mxu0 %v871
    %1324 = vmatprep.subr.bf16.mxu0 0
    %1325 = vmatpush1.bf16.msra.mxu0 %v868
    %1326 = vmatprep.subr.bf16.mxu0 0
    %1327 = vmatpush1.bf16.msra.mxu0 %v865
    %1328 = vmatprep.subr.bf16.mxu0 0
    %1329 = vmatpush1.bf16.msra.mxu0 %v862
    %1330 = vmatprep.subr.bf16.mxu0 0
    %1331 = vmatpush2.bf16.msra.mxu0 %v907
    %1332 = vmatprep.subr.bf16.mxu0 0
    %1333 = vmatpush2.bf16.msra.mxu0 %v904
    %1334 = vmatprep.subr.bf16.mxu0 0
    %1335 = vmatpush2.bf16.msra.mxu0 %v901
    %1336 = vmatprep.subr.bf16.mxu0 0
    %1337 = vmatpush2.bf16.msra.mxu0 %v898
    %1338 = vmatprep.subr.bf16.mxu0 0
    %1339 = vmatpush2.bf16.msra.mxu0 %v895
    %1340 = vmatprep.subr.bf16.mxu0 0
    %1341 = vmatpush2.bf16.msra.mxu0 %v892
    %1342 = vmatprep.subr.bf16.mxu0 0
    %1343 = vmatpush2.bf16.msra.mxu0 %v889
    %1344 = vmatprep.subr.bf16.mxu0 0
    %1345 = vmatpush2.bf16.msra.mxu0 %v886
    %1346 = vmatprep.mubr.bf16.mxu0 %v312
    %1347 = vmatmul.mubr.bf16.gmra.mxu0 %v311
    %v1348 = vpop.f32.mrf.mxu0
    %v1349 = vadd.f32 %v1309, %v1348
    %v1350 = vpop.f32.mrf.mxu0
    %v1351 = vpop.f32.mrf.mxu0
    %v1352 = vpop.f32.mrf.mxu0
    %1353 = vdwg.mxu0
    %1354 = vmatprep.subr.bf16.mxu0 0
    %1355 = vmatpush1.bf16.msra.mxu0 %v931
    %1356 = vmatprep.subr.bf16.mxu0 0
    %1357 = vmatpush1.bf16.msra.mxu0 %v928
    %1358 = vmatprep.subr.bf16.mxu0 0
    %1359 = vmatpush1.bf16.msra.mxu0 %v925
    %1360 = vmatprep.subr.bf16.mxu0 0
    %1361 = vmatpush1.bf16.msra.mxu0 %v922
    %1362 = vmatprep.subr.bf16.mxu0 0
    %1363 = vmatpush1.bf16.msra.mxu0 %v919
    %1364 = vmatprep.subr.bf16.mxu0 0
    %1365 = vmatpush1.bf16.msra.mxu0 %v916
    %1366 = vmatprep.subr.bf16.mxu0 0
    %1367 = vmatpush1.bf16.msra.mxu0 %v913
    %1368 = vmatprep.subr.bf16.mxu0 0
    %1369 = vmatpush1.bf16.msra.mxu0 %v910
    %1370 = vmatprep.subr.bf16.mxu0 0
    %1371 = vmatpush2.bf16.msra.mxu0 %v955
    %1372 = vmatprep.subr.bf16.mxu0 0
    %1373 = vmatpush2.bf16.msra.mxu0 %v952
    %1374 = vmatprep.subr.bf16.mxu0 0
    %1375 = vmatpush2.bf16.msra.mxu0 %v949
    %1376 = vmatprep.subr.bf16.mxu0 0
    %1377 = vmatpush2.bf16.msra.mxu0 %v946
    %1378 = vmatprep.subr.bf16.mxu0 0
    %1379 = vmatpush2.bf16.msra.mxu0 %v943
    %1380 = vmatprep.subr.bf16.mxu0 0
    %1381 = vmatpush2.bf16.msra.mxu0 %v940
    %1382 = vmatprep.subr.bf16.mxu0 0
    %1383 = vmatpush2.bf16.msra.mxu0 %v937
    %1384 = vmatprep.subr.bf16.mxu0 0
    %1385 = vmatpush2.bf16.msra.mxu0 %v934
    %1386 = vmatprep.mubr.bf16.mxu0 %v314
    %1387 = vmatmul.mubr.bf16.gmra.mxu0 %v313
    %v1388 = vpop.f32.mrf.mxu0
    %v1389 = vadd.f32 %v1349, %v1388
    %v1390 = vpop.f32.mrf.mxu0
    %v1391 = vpop.f32.mrf.mxu0
    %v1392 = vpop.f32.mrf.mxu0
    %1393 = vdwg.mxu0
    %1394 = vmatprep.subr.bf16.mxu0 0
    %1395 = vmatpush1.bf16.msra.mxu0 0
    %1396 = vmatprep.subr.bf16.mxu0 0
    %1397 = vmatpush1.bf16.msra.mxu0 0
    %1398 = vmatprep.subr.bf16.mxu0 0
    %1399 = vmatpush1.bf16.msra.mxu0 0
    %1400 = vmatprep.subr.bf16.mxu0 0
    %1401 = vmatpush1.bf16.msra.mxu0 0
    %1402 = vmatprep.subr.bf16.mxu0 0
    %1403 = vmatpush1.bf16.msra.mxu0 0
    %1404 = vmatprep.subr.bf16.mxu0 0
    %1405 = vmatpush1.bf16.msra.mxu0 0
    %1406 = vmatprep.subr.bf16.mxu0 0
    %1407 = vmatpush1.bf16.msra.mxu0 0
    %1408 = vmatprep.subr.bf16.mxu0 0
    %1409 = vmatpush1.bf16.msra.mxu0 %v958
    %1410 = vmatprep.subr.bf16.mxu0 0
    %1411 = vmatpush2.bf16.msra.mxu0 0
    %1412 = vmatprep.subr.bf16.mxu0 0
    %1413 = vmatpush2.bf16.msra.mxu0 0
    %1414 = vmatprep.subr.bf16.mxu0 0
    %1415 = vmatpush2.bf16.msra.mxu0 0
    %1416 = vmatprep.subr.bf16.mxu0 0
    %1417 = vmatpush2.bf16.msra.mxu0 0
    %1418 = vmatprep.subr.bf16.mxu0 0
    %1419 = vmatpush2.bf16.msra.mxu0 0
    %1420 = vmatprep.subr.bf16.mxu0 0
    %1421 = vmatpush2.bf16.msra.mxu0 0
    %1422 = vmatprep.subr.bf16.mxu0 0
    %1423 = vmatpush2.bf16.msra.mxu0 0
    %1424 = vmatprep.subr.bf16.mxu0 0
    %1425 = vmatpush2.bf16.msra.mxu0 0
    %1426 = vmatprep.mubr.bf16.mxu0 0
    %1427 = vmatmul.mubr.bf16.gmra.mxu0 %v1108
    %v1428 = vpop.f32.mrf.mxu0
    %v1429 = vadd.f32 %v1389, %v1428
    %v1430 = vpop.f32.mrf.mxu0
    %v1431 = vpop.f32.mrf.mxu0
    %v1432 = vpop.f32.mrf.mxu0
    %1433 = vdwg.mxu0
    %v1434 = vmax.f32 %v1268, 0.0
    %v1435 = vmax.f32 %v1270, 0.0
    %v1436 = vmax.f32 %v1429, 0.0
    %v1437 = vpack.c.bf16 %v1434, %v1434
    %v1438 = vpack.c.bf16 %v1435, %v1435
    %v1439 = vpack.c.bf16 %v1436, %v1436
    %v1440 = vld [vmem:[#allocation7] sm:$0xf]
    %v1441 = vld [vmem:[#allocation7 + $0x4] sm:$0xf]
    %v1442 = vld [vmem:[#allocation7 + $0x8] sm:$0xf]
    %v1443 = vld [vmem:[#allocation7 + $0xc] sm:$0xf]
    %v1444 = vld [vmem:[#allocation7 + $0x10] sm:$0xf]
    %v1445 = vld [vmem:[#allocation7 + $0x14] sm:$0xf]
    %v1446 = vld [vmem:[#allocation7 + $0x18] sm:$0xf]
    %v1447 = vld [vmem:[#allocation7 + $0x1c] sm:$0xf]
    %v1448 = vld [vmem:[#allocation7 + $0x20] sm:$0xf]
    %v1449 = vld [vmem:[#allocation7 + $0x24] sm:$0xf]
    %v1450 = vld [vmem:[#allocation7 + $0x28] sm:$0xf]
    %v1451 = vld [vmem:[#allocation7 + $0x2c] sm:$0xf]
    %v1452 = vld [vmem:[#allocation7 + $0x30] sm:$0xf]
    %v1453 = vld [vmem:[#allocation7 + $0x34] sm:$0xf]
    %v1454 = vld [vmem:[#allocation7 + $0x38] sm:$0xf]
    %v1455 = vld [vmem:[#allocation7 + $0x3c] sm:$0xf]
    %v1456 = vld [vmem:[#allocation7 + $0x40] sm:$0xf]
    %v1457 = vld [vmem:[#allocation7 + $0x44] sm:$0xf]
    %v1458 = vld [vmem:[#allocation7 + $0x48] sm:$0xf]
    %v1459 = vld [vmem:[#allocation7 + $0x4c] sm:$0xf]
    %v1460 = vld [vmem:[#allocation7 + $0x50] sm:$0xf]
    %v1461 = vld [vmem:[#allocation7 + $0x54] sm:$0xf]
    %v1462 = vld [vmem:[#allocation7 + $0x58] sm:$0xf]
    %v1463 = vld [vmem:[#allocation7 + $0x5c] sm:$0xf]
    %v1464 = vld [vmem:[#allocation7 + $0x60] sm:$0xf]
    %v1465 = vld [vmem:[#allocation7 + $0x64] sm:$0xf]
    %v1466 = vld [vmem:[#allocation7 + $0x68] sm:$0xf]
    %v1467 = vld [vmem:[#allocation7 + $0x6c] sm:$0xf]
    %v1468 = vld [vmem:[#allocation7 + $0x70] sm:$0xf]
    %v1469 = vld [vmem:[#allocation7 + $0x74] sm:$0xf]
    %v1470 = vld [vmem:[#allocation7 + $0x78] sm:$0xf]
    %v1471 = vld [vmem:[#allocation7 + $0x7c] sm:$0xf]
    %v1472 = vld [vmem:[#allocation7 + $0x80] sm:$0xf]
    %v1473 = vld [vmem:[#allocation7 + $0x84] sm:$0xf]
    %v1474 = vld [vmem:[#allocation7 + $0x88] sm:$0xf]
    %v1475 = vld [vmem:[#allocation7 + $0x8c] sm:$0xf]
    %v1476 = vld [vmem:[#allocation7 + $0x90] sm:$0xf]
    %v1477 = vld [vmem:[#allocation7 + $0x94] sm:$0xf]
    %v1478 = vld [vmem:[#allocation7 + $0x98] sm:$0xf]
    %v1479 = vld [vmem:[#allocation7 + $0x9c] sm:$0xf]
    %v1480 = vld [vmem:[#allocation7 + $0xa0] sm:$0xf]
    %v1481 = vld [vmem:[#allocation7 + $0xa4] sm:$0xf]
    %v1482 = vld [vmem:[#allocation7 + $0xa8] sm:$0xf]
    %v1483 = vld [vmem:[#allocation7 + $0xac] sm:$0xf]
    %v1484 = vld [vmem:[#allocation7 + $0xb0] sm:$0xf]
    %v1485 = vld [vmem:[#allocation7 + $0xb4] sm:$0xf]
    %v1486 = vld [vmem:[#allocation7 + $0xb8] sm:$0xf]
    %v1487 = vld [vmem:[#allocation7 + $0xbc] sm:$0xf]
    %v1488 = vld [vmem:[%s4] sm:$0x1]
    %v1490 = vlaneseq
    %v1491 = vshrl.u32 %v1490, 7
    %v1492 = vsub.s32 0, %v1491
    %v1493 = vrot.slane %v1488, %v1492
    %v1543 = vunpack.c.l.b16 %v1440
    %v1544 = vunpack.c.l.b16 %v1441
    %v1545 = vunpack.c.l.b16 %v1442
    %v1546 = vunpack.c.l.b16 %v1443
    %v1547 = vunpack.c.l.b16 %v1444
    %v1548 = vunpack.c.l.b16 %v1445
    %v1549 = vunpack.c.l.b16 %v1446
    %v1550 = vunpack.c.l.b16 %v1447
    %v1551 = vunpack.c.l.b16 %v1448
    %v1552 = vunpack.c.l.b16 %v1449
    %v1553 = vunpack.c.l.b16 %v1450
    %v1554 = vunpack.c.l.b16 %v1451
    %v1555 = vunpack.c.l.b16 %v1452
    %v1556 = vunpack.c.l.b16 %v1453
    %v1557 = vunpack.c.l.b16 %v1454
    %v1558 = vunpack.c.l.b16 %v1455
    %v1559 = vunpack.c.l.b16 %v1456
    %v1560 = vunpack.c.l.b16 %v1457
    %v1561 = vunpack.c.l.b16 %v1458
    %v1562 = vunpack.c.l.b16 %v1459
    %v1563 = vunpack.c.l.b16 %v1460
    %v1564 = vunpack.c.l.b16 %v1461
    %v1565 = vunpack.c.l.b16 %v1462
    %v1566 = vunpack.c.l.b16 %v1463
    %v1567 = vunpack.c.l.b16 %v1464
    %v1568 = vunpack.c.l.b16 %v1465
    %v1569 = vunpack.c.l.b16 %v1466
    %v1570 = vunpack.c.l.b16 %v1467
    %v1571 = vunpack.c.l.b16 %v1468
    %v1572 = vunpack.c.l.b16 %v1469
    %v1573 = vunpack.c.l.b16 %v1470
    %v1574 = vunpack.c.l.b16 %v1471
    %v1575 = vunpack.c.l.b16 %v1472
    %v1576 = vunpack.c.l.b16 %v1473
    %v1577 = vunpack.c.l.b16 %v1474
    %v1578 = vunpack.c.l.b16 %v1475
    %v1579 = vunpack.c.l.b16 %v1476
    %v1580 = vunpack.c.l.b16 %v1477
    %v1581 = vunpack.c.l.b16 %v1478
    %v1582 = vunpack.c.l.b16 %v1479
    %v1583 = vunpack.c.l.b16 %v1480
    %v1584 = vunpack.c.l.b16 %v1481
    %v1585 = vunpack.c.l.b16 %v1482
    %v1586 = vunpack.c.l.b16 %v1483
    %v1587 = vunpack.c.l.b16 %v1484
    %v1588 = vunpack.c.l.b16 %v1485
    %v1589 = vunpack.c.l.b16 %v1486
    %v1590 = vunpack.c.l.b16 %v1487
    %v1591 = vpack.c.b16 %v1544, %v1543
    %v1592 = vpack.c.b16 %v1546, %v1545
    %v1593 = vpack.c.b16 %v1548, %v1547
    %v1594 = vpack.c.b16 %v1550, %v1549
    %v1595 = vpack.c.b16 %v1552, %v1551
    %v1596 = vpack.c.b16 %v1554, %v1553
    %v1597 = vpack.c.b16 %v1556, %v1555
    %v1598 = vpack.c.b16 %v1558, %v1557
    %v1599 = vpack.c.b16 %v1560, %v1559
    %v1600 = vpack.c.b16 %v1562, %v1561
    %v1601 = vpack.c.b16 %v1564, %v1563
    %v1602 = vpack.c.b16 %v1566, %v1565
    %v1603 = vpack.c.b16 %v1568, %v1567
    %v1604 = vpack.c.b16 %v1570, %v1569
    %v1605 = vpack.c.b16 %v1572, %v1571
    %v1606 = vpack.c.b16 %v1574, %v1573
    %v1607 = vpack.c.b16 %v1576, %v1575
    %v1608 = vpack.c.b16 %v1578, %v1577
    %v1609 = vpack.c.b16 %v1580, %v1579
    %v1610 = vpack.c.b16 %v1582, %v1581
    %v1611 = vpack.c.b16 %v1584, %v1583
    %v1612 = vpack.c.b16 %v1586, %v1585
    %v1613 = vpack.c.b16 %v1588, %v1587
    %v1614 = vpack.c.b16 %v1590, %v1589
    %1639 = vmatprep.subr.bf16.mxu0 0
    %1640 = vmatpush1.bf16.msra.mxu0 %v1598
    %1641 = vmatprep.subr.bf16.mxu0 0
    %1642 = vmatpush1.bf16.msra.mxu0 %v1597
    %1643 = vmatprep.subr.bf16.mxu0 0
    %1644 = vmatpush1.bf16.msra.mxu0 %v1596
    %1645 = vmatprep.subr.bf16.mxu0 0
    %1646 = vmatpush1.bf16.msra.mxu0 %v1595
    %1647 = vmatprep.subr.bf16.mxu0 0
    %1648 = vmatpush1.bf16.msra.mxu0 %v1594
    %1649 = vmatprep.subr.bf16.mxu0 0
    %1650 = vmatpush1.bf16.msra.mxu0 %v1593
    %1651 = vmatprep.subr.bf16.mxu0 0
    %1652 = vmatpush1.bf16.msra.mxu0 %v1592
    %1653 = vmatprep.subr.bf16.mxu0 0
    %1654 = vmatpush1.bf16.msra.mxu0 %v1591
    %1655 = vmatprep.subr.bf16.mxu0 0
    %1656 = vmatpush2.bf16.msra.mxu0 %v1606
    %1657 = vmatprep.subr.bf16.mxu0 0
    %1658 = vmatpush2.bf16.msra.mxu0 %v1605
    %1659 = vmatprep.subr.bf16.mxu0 0
    %1660 = vmatpush2.bf16.msra.mxu0 %v1604
    %1661 = vmatprep.subr.bf16.mxu0 0
    %1662 = vmatpush2.bf16.msra.mxu0 %v1603
    %1663 = vmatprep.subr.bf16.mxu0 0
    %1664 = vmatpush2.bf16.msra.mxu0 %v1602
    %1665 = vmatprep.subr.bf16.mxu0 0
    %1666 = vmatpush2.bf16.msra.mxu0 %v1601
    %1667 = vmatprep.subr.bf16.mxu0 0
    %1668 = vmatpush2.bf16.msra.mxu0 %v1600
    %1669 = vmatprep.subr.bf16.mxu0 0
    %1670 = vmatpush2.bf16.msra.mxu0 %v1599
    %1671 = vmatprep.mubr.bf16.mxu0 %v1438
    %1672 = vmatmul.mubr.bf16.gmra.mxu0 %v1437
    %v1673 = vpop.f32.mrf.mxu0
    %v1674 = vadd.f32 %v1493, %v1673
    %v1675 = vpop.f32.mrf.mxu0
    %v1676 = vpop.f32.mrf.mxu0
    %v1677 = vpop.f32.mrf.mxu0
    %1678 = vdwg.mxu0
    %1679 = vmatprep.subr.bf16.mxu0 0
    %1680 = vmatpush1.bf16.msra.mxu0 %v1614
    %1681 = vmatprep.subr.bf16.mxu0 0
    %1682 = vmatpush1.bf16.msra.mxu0 %v1613
    %1683 = vmatprep.subr.bf16.mxu0 0
    %1684 = vmatpush1.bf16.msra.mxu0 %v1612
    %1685 = vmatprep.subr.bf16.mxu0 0
    %1686 = vmatpush1.bf16.msra.mxu0 %v1611
    %1687 = vmatprep.subr.bf16.mxu0 0
    %1688 = vmatpush1.bf16.msra.mxu0 %v1610
    %1689 = vmatprep.subr.bf16.mxu0 0
    %1690 = vmatpush1.bf16.msra.mxu0 %v1609
    %1691 = vmatprep.subr.bf16.mxu0 0
    %1692 = vmatpush1.bf16.msra.mxu0 %v1608
    %1693 = vmatprep.subr.bf16.mxu0 0
    %1694 = vmatpush1.bf16.msra.mxu0 %v1607
    %1695 = vmatprep.subr.bf16.mxu0 0
    %1696 = vmatpush2.bf16.msra.mxu0 0
    %1697 = vmatprep.subr.bf16.mxu0 0
    %1698 = vmatpush2.bf16.msra.mxu0 0
    %1699 = vmatprep.subr.bf16.mxu0 0
    %1700 = vmatpush2.bf16.msra.mxu0 0
    %1701 = vmatprep.subr.bf16.mxu0 0
    %1702 = vmatpush2.bf16.msra.mxu0 0
    %1703 = vmatprep.subr.bf16.mxu0 0
    %1704 = vmatpush2.bf16.msra.mxu0 0
    %1705 = vmatprep.subr.bf16.mxu0 0
    %1706 = vmatpush2.bf16.msra.mxu0 0
    %1707 = vmatprep.subr.bf16.mxu0 0
    %1708 = vmatpush2.bf16.msra.mxu0 0
    %1709 = vmatprep.subr.bf16.mxu0 0
    %1710 = vmatpush2.bf16.msra.mxu0 0
    %1711 = vmatprep.mubr.bf16.mxu0 0
    %1712 = vmatmul.mubr.bf16.gmra.mxu0 %v1439
    %v1713 = vpop.f32.mrf.mxu0
    %v1714 = vadd.f32 %v1674, %v1713
    %v1715 = vpop.f32.mrf.mxu0
    %v1716 = vpop.f32.mrf.mxu0
    %v1717 = vpop.f32.mrf.mxu0
    %1718 = vdwg.mxu0
    %v1719 = vmax.f32 %v1714, 0.0
    %v1720 = vpack.c.bf16 %v1719, %v1719
    %v1721 = vld [vmem:[#allocation8] sm:$0xf]
    %v1722 = vld [vmem:[#allocation8 + $0x4] sm:$0xf]
    %v1723 = vld [vmem:[#allocation8 + $0x8] sm:$0xf]
    %v1724 = vld [vmem:[#allocation8 + $0xc] sm:$0xf]
    %v1725 = vld [vmem:[#allocation8 + $0x10] sm:$0xf]
    %v1726 = vld [vmem:[#allocation8 + $0x14] sm:$0xf]
    %v1727 = vld [vmem:[#allocation8 + $0x18] sm:$0xf]
    %v1728 = vld [vmem:[#allocation8 + $0x1c] sm:$0xf]
    %v1729 = vld [vmem:[#allocation8 + $0x20] sm:$0xf]
    %v1730 = vld [vmem:[#allocation8 + $0x24] sm:$0xf]
    %v1731 = vld [vmem:[#allocation8 + $0x28] sm:$0xf]
    %v1732 = vld [vmem:[#allocation8 + $0x2c] sm:$0xf]
    %v1733 = vld [vmem:[#allocation8 + $0x30] sm:$0xf]
    %v1734 = vld [vmem:[#allocation8 + $0x34] sm:$0xf]
    %v1735 = vld [vmem:[#allocation8 + $0x38] sm:$0xf]
    %v1736 = vld [vmem:[#allocation8 + $0x3c] sm:$0xf]
    %v1737 = vld [vmem:[%s6] sm:$0x1]
    %v1739 = vlaneseq
    %v1740 = vshrl.u32 %v1739, 7
    %v1741 = vsub.s32 0, %v1740
    %v1742 = vrot.slane %v1737, %v1741
    %v1760 = vunpack.c.l.b16 %v1721
    %v1761 = vunpack.c.l.b16 %v1722
    %v1762 = vunpack.c.l.b16 %v1723
    %v1763 = vunpack.c.l.b16 %v1724
    %v1764 = vunpack.c.l.b16 %v1725
    %v1765 = vunpack.c.l.b16 %v1726
    %v1766 = vunpack.c.l.b16 %v1727
    %v1767 = vunpack.c.l.b16 %v1728
    %v1768 = vunpack.c.l.b16 %v1729
    %v1769 = vunpack.c.l.b16 %v1730
    %v1770 = vunpack.c.l.b16 %v1731
    %v1771 = vunpack.c.l.b16 %v1732
    %v1772 = vunpack.c.l.b16 %v1733
    %v1773 = vunpack.c.l.b16 %v1734
    %v1774 = vunpack.c.l.b16 %v1735
    %v1775 = vunpack.c.l.b16 %v1736
    %v1776 = vpack.c.b16 %v1761, %v1760
    %v1777 = vpack.c.b16 %v1763, %v1762
    %v1778 = vpack.c.b16 %v1765, %v1764
    %v1779 = vpack.c.b16 %v1767, %v1766
    %v1780 = vpack.c.b16 %v1769, %v1768
    %v1781 = vpack.c.b16 %v1771, %v1770
    %v1782 = vpack.c.b16 %v1773, %v1772
    %v1783 = vpack.c.b16 %v1775, %v1774
    %1792 = vmatprep.subr.bf16.mxu0 0
    %1793 = vmatpush1.bf16.msra.mxu0 %v1783
    %1794 = vmatprep.subr.bf16.mxu0 0
    %1795 = vmatpush1.bf16.msra.mxu0 %v1782
    %1796 = vmatprep.subr.bf16.mxu0 0
    %1797 = vmatpush1.bf16.msra.mxu0 %v1781
    %1798 = vmatprep.subr.bf16.mxu0 0
    %1799 = vmatpush1.bf16.msra.mxu0 %v1780
    %1800 = vmatprep.subr.bf16.mxu0 0
    %1801 = vmatpush1.bf16.msra.mxu0 %v1779
    %1802 = vmatprep.subr.bf16.mxu0 0
    %1803 = vmatpush1.bf16.msra.mxu0 %v1778
    %1804 = vmatprep.subr.bf16.mxu0 0
    %1805 = vmatpush1.bf16.msra.mxu0 %v1777
    %1806 = vmatprep.subr.bf16.mxu0 0
    %1807 = vmatpush1.bf16.msra.mxu0 %v1776
    %1808 = vmatprep.subr.bf16.mxu0 0
    %1809 = vmatpush2.bf16.msra.mxu0 0
    %1810 = vmatprep.subr.bf16.mxu0 0
    %1811 = vmatpush2.bf16.msra.mxu0 0
    %1812 = vmatprep.subr.bf16.mxu0 0
    %1813 = vmatpush2.bf16.msra.mxu0 0
    %1814 = vmatprep.subr.bf16.mxu0 0
    %1815 = vmatpush2.bf16.msra.mxu0 0
    %1816 = vmatprep.subr.bf16.mxu0 0
    %1817 = vmatpush2.bf16.msra.mxu0 0
    %1818 = vmatprep.subr.bf16.mxu0 0
    %1819 = vmatpush2.bf16.msra.mxu0 0
    %1820 = vmatprep.subr.bf16.mxu0 0
    %1821 = vmatpush2.bf16.msra.mxu0 0
    %1822 = vmatprep.subr.bf16.mxu0 0
    %1823 = vmatpush2.bf16.msra.mxu0 0
    %1824 = vmatprep.mubr.bf16.mxu0 0
    %1825 = vmatmul.mubr.bf16.gmra.mxu0 %v1720
    %v1826 = vpop.f32.mrf.mxu0
    %v1827 = vadd.f32 %v1742, %v1826
    %v1828 = vpop.f32.mrf.mxu0
    %v1829 = vpop.f32.mrf.mxu0
    %v1830 = vpop.f32.mrf.mxu0
    %1831 = vdwg.mxu0
    %1832 = vst [vmem:[#allocation10] sm:$0xff] %v1827
    // Predicated region
    $region46: #{tpu_custom_call.1} parent=1 // pred_check
      _
    $region47: #{tpu_custom_call.1} parent=1 // pred_check_branch
      %1834 = sbr.rel (0) target = $region49
    $region48: #{tpu_custom_call.1} parent=1 // pred_region
      %s1836 = ssub.s32 128, 128
      %1837 = vsyncadd [#allocation4], %s1836
      %s1839 = sshll.u32 [#allocation10], 4
      %s1840 = int_to_ptr.vmem [resolvable:$true] %s1839
      %1842 = dma.vmem_to_hbm [thread:$0]  %s1840, 128, %s7, [#allocation4]
    $region49: #{tpu_custom_call.1} parent=1 // pred_fallthru
      _
    // Predicated region
    $region50: #{tpu_custom_call.1} parent=1 // pred_check
      _
    $region51: #{tpu_custom_call.1} parent=1 // pred_check_branch
      %1844 = sbr.rel (0) target = $region53
    $region52: #{tpu_custom_call.1} parent=1 // pred_region
      %1845 = dma.done [#allocation4], 128
    $region53: #{tpu_custom_call.1} parent=1 // pred_fallthru
      _
    %1846 = vsyncpa [#allocation3], 1
    %1847 = vsyncpa [#allocation6], 1
    %1848 = vsyncpa [#allocation9], 1
    %1849 = vsyncpa [#allocation4], 1

</llo_original>
